<compile_context>
chip_gen: v7x
topology: tpu7x:2x2x1
jax: 0.10.0
libtpu: 0.0.40
codegen_flags: <defaults>
</compile_context>

<pallas_src>
import functools

import jax
import jax.numpy as jnp
from jax.experimental import pallas as pl
from jax.experimental.pallas import tpu as pltpu

LANE = 128          # TPU lane width
SUB = 8             # sublanes per f32 vreg
_BN_EPS = 1e-5
_SMALL_GRAPH_MAX = 512


def _round_up(x, m):
    return (x + m - 1) // m * m


def _pad_lanes_emb(e):
    """Pad the embedding dim: 128 if it fits, else a multiple of 256 (v6e/v7x MXU)."""
    e_pad = _round_up(e, LANE)
    if e_pad > LANE:
        e_pad = _round_up(e, 2 * LANE)
    return e_pad


def _choose_tiles(n):
    """Row tile and (larger, rectangular) reduction tile for the tiled aggregate.

    tile_k is a multiple of tile_i, capped at 2048 (bf16 A block <= 2 MiB) and only
    enlarged while padding n up to a multiple of tile_k wastes at most ~n/8 rows."""
    tile_i = 256 if n <= 1024 else 512
    tile_k = tile_i
    while tile_k * 2 <= 2048 and _round_up(n, tile_k * 2) - n <= max(n // 8, tile_i):
        tile_k *= 2
    return tile_i, tile_k


def _agg_vmem_limit(tile_i, tile_k, n_pad, e_pad):
    """Explicit VMEM budget for the aggregate kernel (v7x: 64 MiB physical)."""
    need = (2 * tile_i * tile_k * 2        # A blocks (bf16), double-buffered
            + 2 * n_pad * e_pad * 2        # resident m (bf16), conservatively x2
            + 2 * tile_i * e_pad * 4       # conv accumulator block
            + 4 * SUB * e_pad * 4          # per-row-tile BN stats blocks
            + (2 << 20))                   # headroom
    return int(min(64 * 1024 * 1024, max(need, 16 * 1024 * 1024)))


def _small_graph_vmem_ok(n_pad, f_pad, e_pad, num_layer):
    need = (n_pad * f_pad * 4 + n_pad * n_pad * 2 + f_pad * e_pad * 4
            + num_layer * (e_pad * e_pad * 4 + 3 * e_pad * 4)
            + 4 * n_pad * e_pad * 4)
    return need < 24 * 1024 * 1024


def _pad2(a, rows, cols, dtype=jnp.float32):
    a = a.astype(dtype)
    return jnp.pad(a, ((0, rows - a.shape[0]), (0, cols - a.shape[1])))


# ----------------------------- Pallas kernels ------------------------------


def _make_linear_kernel(pre_relu, post_relu):
    """o = [relu]( [relu](x * scale + shift) @ W + b )

    The previous layer's BatchNorm is folded in via (scale, shift); the MXU
    accumulates in f32; the output dtype (bf16 for m, f32 otherwise) comes from
    o_ref."""
    def kernel(x_ref, scale_ref, shift_ref, w_ref, b_ref, o_ref):
        h = x_ref[...] * scale_ref[...] + shift_ref[...]
        if pre_relu:
            h = jnp.maximum(h, 0.0)
        y = jnp.dot(h, w_ref[...], preferred_element_type=jnp.float32) + b_ref[...]
        if post_relu:
            y = jnp.maximum(y, 0.0)
        o_ref[...] = y.astype(o_ref.dtype)
    return kernel


def _make_agg_kernel(tile_k):
    """conv[i_tile] = sum_k A_aug[i_tile, k_tile] @ m[k_tile]  (bf16 MXU, f32 acc)

    m is fully resident in VMEM (constant index_map) and sliced with pl.ds, so A is
    the only streamed operand.  conv (f32 output, constant index over k) is the
    accumulator itself.  At the last reduction step the per-row-tile BatchNorm
    partial sums are written into row 0 of an 8-row output block."""
    def kernel(a_ref, m_ref, conv_ref, sum_ref, sumsq_ref):
        k = pl.program_id(1)

        @pl.when(k == 0)
        def _():
            conv_ref[...] = jnp.zeros_like(conv_ref)

        start = pl.multiple_of(k * tile_k, tile_k)
        conv_ref[...] += jnp.dot(a_ref[...], m_ref[pl.ds(start, tile_k), :],
                                 preferred_element_type=jnp.float32)

        @pl.when(k == pl.num_programs(1) - 1)
        def _():
            conv = conv_ref[...]
            ridx = jax.lax.broadcasted_iota(jnp.int32, (SUB, conv.shape[1]), 0)
            sum_ref[...] = jnp.where(
                ridx == 0, jnp.sum(conv, axis=0, keepdims=True), 0.0)
            sumsq_ref[...] = jnp.where(
                ridx == 0, jnp.sum(conv * conv, axis=0, keepdims=True), 0.0)
    return kernel


def _scale_shift_kernel(x_ref, scale_ref, shift_ref, o_ref):
    # Standalone BatchNorm apply for the final layer (no ReLU).
    o_ref[...] = x_ref[...] * scale_ref[...] + shift_ref[...]


def _make_small_graph_kernel(num_layer, inv_n, eps=_BN_EPS):
    """Whole forward (encoder + all GCN layers + BN) for graphs that fit VMEM.

    One launch, no HBM round trips for h / m / conv.  A is bf16, matmuls accumulate
    in f32."""
    def kernel(x_ref, a_ref, enc_w_ref, enc_b_ref, *refs):
        o_ref = refs[-1]
        lrefs = refs[:-1]
        h = jnp.maximum(
            jnp.dot(x_ref[...], enc_w_ref[...],
                    preferred_element_type=jnp.float32) + enc_b_ref[...], 0.0)
        a = a_ref[...]                                   # bf16
        for l in range(num_layer):
            w_ref, b_ref, g_ref, bt_ref = lrefs[4 * l: 4 * l + 4]
            m = jnp.maximum(
                jnp.dot(h, w_ref[...], preferred_element_type=jnp.float32)
                + b_ref[...], 0.0)
            conv = jnp.dot(a, m.astype(jnp.bfloat16),
                           preferred_element_type=jnp.float32)
            # BN stats over the true node count; padded conv rows are exactly zero.
            mean = jnp.sum(conv, axis=0, keepdims=True) * inv_n
            ex2 = jnp.sum(conv * conv, axis=0, keepdims=True) * inv_n
            var = jnp.maximum(ex2 - mean * mean, 0.0)
            scale = jax.lax.rsqrt(var + eps) * g_ref[...]
            shift = bt_ref[...] - mean * scale
            h = conv * scale + shift
            if l != num_layer - 1:
                h = jnp.maximum(h, 0.0)
        o_ref[...] = h
    return kernel


# --------------------------- pallas_call wrappers ---------------------------


def _linear(x, scale, shift, w, b, tile_i, *, pre_relu, post_relu, out_dtype):
    n_pad, f_in = x.shape
    f_out = w.shape[1]
    return pl.pallas_call(
        _make_linear_kernel(pre_relu, post_relu),
        out_shape=jax.ShapeDtypeStruct((n_pad, f_out), out_dtype),
        grid=(n_pad // tile_i,),
        in_specs=[
            pl.BlockSpec((tile_i, f_in), lambda i: (i, 0)),
            pl.BlockSpec((1, f_in), lambda i: (0, 0)),
            pl.BlockSpec((1, f_in), lambda i: (0, 0)),
            pl.BlockSpec((f_in, f_out), lambda i: (0, 0)),
            pl.BlockSpec((1, f_out), lambda i: (0, 0)),
        ],
        out_specs=pl.BlockSpec((tile_i, f_out), lambda i: (i, 0)),
        compiler_params=pltpu.CompilerParams(dimension_semantics=("parallel",)),
    )(x, scale, shift, w, b)


def _aggregate(a_aug, m, tile_i, tile_k):
    n_pad = a_aug.shape[0]
    e_pad = m.shape[1]
    nt_i = n_pad // tile_i
    nt_k = n_pad // tile_k
    conv, sums, sumsqs = pl.pallas_call(
        _make_agg_kernel(tile_k),
        out_shape=(
            jax.ShapeDtypeStruct((n_pad, e_pad), jnp.float32),     # conv
            jax.ShapeDtypeStruct((nt_i * SUB, e_pad), jnp.float32),  # per-tile col sums
            jax.ShapeDtypeStruct((nt_i * SUB, e_pad), jnp.float32),  # per-tile col sum sq
        ),
        grid=(nt_i, nt_k),                                   # rows parallel, reduction last
        in_specs=[
            pl.BlockSpec((tile_i, tile_k), lambda i, k: (i, k)),   # A_aug (bf16, streamed)
            pl.BlockSpec((n_pad, e_pad), lambda i, k: (0, 0)),     # m (bf16, VMEM-resident)
        ],
        out_specs=(
            pl.BlockSpec((tile_i, e_pad), lambda i, k: (i, 0)),    # f32 accumulator
            pl.BlockSpec((SUB, e_pad), lambda i, k: (i, 0)),
            pl.BlockSpec((SUB, e_pad), lambda i, k: (i, 0)),
        ),
        compiler_params=pltpu.CompilerParams(
            dimension_semantics=("parallel", "arbitrary"),
            vmem_limit_bytes=_agg_vmem_limit(tile_i, tile_k, n_pad, e_pad)),
    )(a_aug, m)
    return conv, sums, sumsqs


def _scale_shift(x, scale, shift, tile_i):
    n_pad, e_pad = x.shape
    return pl.pallas_call(
        _scale_shift_kernel,
        out_shape=jax.ShapeDtypeStruct((n_pad, e_pad), jnp.float32),
        grid=(n_pad // tile_i,),
        in_specs=[
            pl.BlockSpec((tile_i, e_pad), lambda i: (i, 0)),
            pl.BlockSpec((1, e_pad), lambda i: (0, 0)),
            pl.BlockSpec((1, e_pad), lambda i: (0, 0)),
        ],
        out_specs=pl.BlockSpec((tile_i, e_pad), lambda i: (i, 0)),
        compiler_params=pltpu.CompilerParams(dimension_semantics=("parallel",)),
    )(x, scale, shift)


# ------------------------------- JAX glue -----------------------------------


def build_adjacency_aug(edge_index, num_nodes, n_pad):
    """Dense normalized adjacency with "+ relu(x)/deg" folded into the diagonal,
    zero-padded to (n_pad, n_pad) and stored in bfloat16 (MXU-native; halves the
    dominant HBM stream).  Padded rows/cols are exactly zero — the kernels rely on
    this.  For a static graph this can be hoisted out of the jitted forward."""
    row, col = edge_index[0], edge_index[1]
    deg = jnp.zeros((num_nodes,), jnp.float32).at[row].add(1.0) + 1.0
    deg_inv_sqrt = jax.lax.rsqrt(deg)                 # deg >= 1, never inf
    norm = deg_inv_sqrt[row] * deg_inv_sqrt[col]
    a = jnp.zeros((num_nodes, num_nodes), jnp.float32)
    a = a.at[col, row].add(norm)                      # message j=row -> target i=col
    diag = jnp.arange(num_nodes)
    a = a.at[diag, diag].add(1.0 / deg)               # folds "+ relu(x)/deg"
    a = a.astype(jnp.bfloat16)
    out = jnp.zeros((n_pad, n_pad), jnp.bfloat16)
    return out.at[:num_nodes, :num_nodes].set(a)


def _bn_scale_shift(sums, sumsqs, gamma, beta, n_true, eps=_BN_EPS):
    """Tiny (1,e) reduce of the per-row-tile partial stats -> BN scale/shift."""
    inv_n = 1.0 / float(n_true)
    mean = jnp.sum(sums, axis=0, keepdims=True) * inv_n
    ex2 = jnp.sum(sumsqs, axis=0, keepdims=True) * inv_n
    var = jnp.maximum(ex2 - mean * mean, 0.0)
    scale = jax.lax.rsqrt(var + eps) * gamma
    shift = beta - mean * scale
    return scale, shift


@functools.partial(jax.jit, static_argnames=("num_layer",))
def gnn_node_forward(x, edge_index, params, *, num_layer):
    n, f = x.shape
    e = params["enc_w"].shape[1]
    e_pad = _pad_lanes_emb(e)
    f_pad = _round_up(f, LANE)

    # ---------------- small-graph fused fast path ----------------
    n_pad_small = _round_up(max(n, SUB), LANE)
    if n <= _SMALL_GRAPH_MAX and _small_graph_vmem_ok(n_pad_small, f_pad, e_pad, num_layer):
        n_pad = n_pad_small
        xp = _pad2(x, n_pad, f_pad)
        a_aug = build_adjacency_aug(edge_index, n, n_pad)
        enc_w = _pad2(params["enc_w"], f_pad, e_pad)
        enc_b = _pad2(params["enc_b"], 1, e_pad)
        layer_args = []
        for l in range(num_layer):
            layer_args += [
                _pad2(params["conv_w"][l], e_pad, e_pad),
                _pad2(params["conv_b"][l], 1, e_pad),
                _pad2(params["bn_gamma"][l], 1, e_pad),
                _pad2(params["bn_beta"][l], 1, e_pad),
            ]
        h = pl.pallas_call(
            _make_small_graph_kernel(num_layer, 1.0 / float(n)),
            out_shape=jax.ShapeDtypeStruct((n_pad, e_pad), jnp.float32),
        )(xp, a_aug, enc_w, enc_b, *layer_args)
        return h[:n, :e]

    # ---------------------- tiled path ----------------------
    tile_i, tile_k = _choose_tiles(n)
    n_pad = _round_up(n, tile_k)

    xp = _pad2(x, n_pad, f_pad)
    a_aug = build_adjacency_aug(edge_index, n, n_pad)
    enc_w = _pad2(params["enc_w"], f_pad, e_pad)
    enc_b = _pad2(params["enc_b"], 1, e_pad)

    ones_f = jnp.ones((1, f_pad), jnp.float32)
    zeros_f = jnp.zeros((1, f_pad), jnp.float32)
    ones_e = jnp.ones((1, e_pad), jnp.float32)
    zeros_e = jnp.zeros((1, e_pad), jnp.float32)

    # node_encoder: h0 = relu(x @ We + be)
    h = _linear(xp, ones_f, zeros_f, enc_w, enc_b, tile_i,
                pre_relu=False, post_relu=True, out_dtype=jnp.float32)

    scale, shift = ones_e, zeros_e
    pre_relu = False                       # h0 already has ReLU applied
    for layer in range(num_layer):
        w = _pad2(params["conv_w"][layer], e_pad, e_pad)
        b = _pad2(params["conv_b"][layer], 1, e_pad)
        gamma = _pad2(params["bn_gamma"][layer], 1, e_pad)
        beta = _pad2(params["bn_beta"][layer], 1, e_pad)

        # m = relu( BN_{prev}(h)[+relu] @ W + b ), stored bf16 for the aggregate MXU
        m = _linear(h, scale, shift, w, b, tile_i,
                    pre_relu=pre_relu, post_relu=True, out_dtype=jnp.bfloat16)
        # conv = (A_hat + diag(1/deg)) @ m, plus per-row-tile BN partial stats
        conv, sums, sumsqs = _aggregate(a_aug, m, tile_i, tile_k)
        scale, shift = _bn_scale_shift(sums, sumsqs, gamma, beta, n)
        h = conv
        pre_relu = True                    # BN output gets ReLU before every fused next linear
        # TODO(synk): training-mode dropout is stochastic; implemented as identity.

    # last layer: standalone BN (no ReLU); JK == 'last', residual == False
    out = _scale_shift(h, scale, shift, tile_i)
    return out[:n, :e]


# --------------------------- reference (pure JAX) ----------------------------


def reference_forward(x, edge_index, params, num_layer, eps=_BN_EPS):
    n = x.shape[0]
    row, col = edge_index[0], edge_index[1]
    deg = jnp.zeros((n,), jnp.float32).at[row].add(1.0) + 1.0
    dis = 1.0 / jnp.sqrt(deg)
    norm = dis[row] * dis[col]
    a_hat = jnp.zeros((n, n), jnp.float32).at[col, row].add(norm)
    h = jnp.maximum(x @ params["enc_w"] + params["enc_b"], 0.0)
    for layer in range(num_layer):
        m = jnp.maximum(h @ params["conv_w"][layer] + params["conv_b"][layer], 0.0)
        conv = a_hat @ m + m / deg[:, None]
        mean = jnp.mean(conv, axis=0, keepdims=True)
        var = jnp.mean((conv - mean) ** 2, axis=0, keepdims=True)
        h = (conv - mean) / jnp.sqrt(var + eps) * params["bn_gamma"][layer] \
            + params["bn_beta"][layer]
        if layer != num_layer - 1:
            h = jnp.maximum(h, 0.0)
    return h


# ------------------------------ parameter init ------------------------------


def init_params(key, fea_dim, emb_dim, num_layer):
    keys = jax.random.split(key, 2 + 2 * num_layer)
    params = {
        "enc_w": jax.random.normal(keys[0], (fea_dim, emb_dim), jnp.float32) * 0.1,
        "enc_b": jax.random.normal(keys[1], (1, emb_dim), jnp.float32) * 0.1,
        "conv_w": [],
        "conv_b": [],
        "bn_gamma": [],
        "bn_beta": [],
    }
    for layer in range(num_layer):
        kw, kb = keys[2 + 2 * layer], keys[3 + 2 * layer]
        params["conv_w"].append(
            jax.random.normal(kw, (emb_dim, emb_dim), jnp.float32) * 0.1)
        params["conv_b"].append(
            jax.random.normal(kb, (1, emb_dim), jnp.float32) * 0.1)
        params["bn_gamma"].append(jnp.ones((1, emb_dim), jnp.float32))
        params["bn_beta"].append(jnp.zeros((1, emb_dim), jnp.float32))
    return params


# ----------------------------------- main ------------------------------------


if __name__ == "__main__":
    key = jax.random.PRNGKey(0)
    k_x1, k_e1, k_p, k_x2, k_e2 = jax.random.split(key, 5)

    FEA_DIM = 8
    EMB_DIM = 32
    NUM_LAYER = 2
    params = init_params(k_p, FEA_DIM, EMB_DIM, NUM_LAYER)

    def check(out, ref, tag):
        # Tolerance is deliberately loosened vs. the pure-f32 reference because
        # A_aug / m feed the MXU in bfloat16 (per perf review); the BN
        # standardization amplifies the ~0.3% operand rounding over the layers.
        scale = jnp.maximum(jnp.max(jnp.abs(ref)), 1.0)
        err = float(jnp.max(jnp.abs(out - ref)) / scale)
        assert err < 5e-2, f"{tag}: normalized max error {err:.4f} vs f32 reference"

    # --- small-graph fused fast path (N=32 -> one fused kernel for the net) ---
    N1, E1 = 32, 64
    x1 = jax.random.normal(k_x1, (N1, FEA_DIM), jnp.float32)
    ei1 = jax.random.randint(k_e1, (2, E1), 0, N1, dtype=jnp.int32)
    out1 = jax.block_until_ready(gnn_node_forward(x1, ei1, params, num_layer=NUM_LAYER))
    assert out1.shape == (N1, EMB_DIM)
    assert bool(jnp.all(jnp.isfinite(out1)))
    check(out1, reference_forward(x1, ei1, params, NUM_LAYER), "small-graph path")

    # --- tiled path (row-tiled grid, bf16 A stream, VMEM-resident m, fused BN) ---
    N2, E2 = 600, 2400
    x2 = jax.random.normal(k_x2, (N2, FEA_DIM), jnp.float32)
    ei2 = jax.random.randint(k_e2, (2, E2), 0, N2, dtype=jnp.int32)
    out2 = jax.block_until_ready(gnn_node_forward(x2, ei2, params, num_layer=NUM_LAYER))
    assert out2.shape == (N2, EMB_DIM)
    assert bool(jnp.all(jnp.isfinite(out2)))
    check(out2, reference_forward(x2, ei2, params, NUM_LAYER), "tiled path")

    print("KERNEL_OK")
</pallas_src>

<mosaic_0001>
module attributes {stable_mosaic.version = 11 : i64} {
  func.func private @main(%arg0: i32) attributes {dimension_semantics = [#tpu.dimension_semantics<core_parallel>], iteration_bounds = array<i64: 2>, tpu.core_type = #tpu.core_type<sc_scalar_subcore>, window_params = []} {
    return
  }
}

module attributes {stable_mosaic.version = 11 : i64} {
  func.func private @main(%arg0: i32) attributes {dimension_semantics = [#tpu.dimension_semantics<core_parallel>], iteration_bounds = array<i64: 2>, tpu.core_type = #tpu.core_type<sc_scalar_subcore>, window_params = []} {
    return
  }
}

module attributes {stable_mosaic.version = 11 : i64} {
  func.func @kernel(%arg0: memref<128x128xf32, #tpu.memory_space<vmem>>, %arg1: memref<128x128xbf16, #tpu.memory_space<vmem>>, %arg2: memref<128x128xf32, #tpu.memory_space<vmem>>, %arg3: memref<1x128xf32, #tpu.memory_space<vmem>>, %arg4: memref<128x128xf32, #tpu.memory_space<vmem>>, %arg5: memref<1x128xf32, #tpu.memory_space<vmem>>, %arg6: memref<1x128xf32, #tpu.memory_space<vmem>>, %arg7: memref<1x128xf32, #tpu.memory_space<vmem>>, %arg8: memref<128x128xf32, #tpu.memory_space<vmem>>, %arg9: memref<1x128xf32, #tpu.memory_space<vmem>>, %arg10: memref<1x128xf32, #tpu.memory_space<vmem>>, %arg11: memref<1x128xf32, #tpu.memory_space<vmem>>, %arg12: memref<128x128xf32, #tpu.memory_space<vmem>>) attributes {dimension_semantics = [], scalar_prefetch = 0 : i64, scratch_operands = 0 : i64, tpu.core_type = #tpu.core_type<tc>} {
    %c0 = arith.constant 0 : index
    %c0_0 = arith.constant 0 : index
    %0 = vector.load %arg0[%c0, %c0_0] : memref<128x128xf32, #tpu.memory_space<vmem>>, vector<128x128xf32>
    %c0_1 = arith.constant 0 : index
    %c0_2 = arith.constant 0 : index
    %1 = vector.load %arg2[%c0_1, %c0_2] : memref<128x128xf32, #tpu.memory_space<vmem>>, vector<128x128xf32>
    %cst = arith.constant dense<0.000000e+00> : vector<128x128xf32>
    %2 = tpu.matmul %0, %1, %cst {dimension_numbers = #tpu.dot_dimension_numbers<[1], [0], [0], [1], [0, 0, 1, 1], [], []>} : vector<128x128xf32>, vector<128x128xf32>, vector<128x128xf32> -> vector<128x128xf32>
    %c0_3 = arith.constant 0 : index
    %c0_4 = arith.constant 0 : index
    %3 = vector.load %arg3[%c0_3, %c0_4] : memref<1x128xf32, #tpu.memory_space<vmem>>, vector<1x128xf32>
    %4 = vector.broadcast %3 : vector<1x128xf32> to vector<128x128xf32>
    %5 = arith.addf %2, %4 : vector<128x128xf32>
    %cst_5 = arith.constant 0.000000e+00 : f32
    %6 = vector.broadcast %cst_5 : f32 to vector<128x128xf32>
    %7 = arith.maximumf %5, %6 : vector<128x128xf32>
    %c0_6 = arith.constant 0 : index
    %c0_7 = arith.constant 0 : index
    %8 = vector.load %arg1[%c0_6, %c0_7] : memref<128x128xbf16, #tpu.memory_space<vmem>>, vector<128x128xbf16>
    %c0_8 = arith.constant 0 : index
    %c0_9 = arith.constant 0 : index
    %9 = vector.load %arg4[%c0_8, %c0_9] : memref<128x128xf32, #tpu.memory_space<vmem>>, vector<128x128xf32>
    %cst_10 = arith.constant dense<0.000000e+00> : vector<128x128xf32>
    %10 = tpu.matmul %7, %9, %cst_10 {dimension_numbers = #tpu.dot_dimension_numbers<[1], [0], [0], [1], [0, 0, 1, 1], [], []>} : vector<128x128xf32>, vector<128x128xf32>, vector<128x128xf32> -> vector<128x128xf32>
    %c0_11 = arith.constant 0 : index
    %c0_12 = arith.constant 0 : index
    %11 = vector.load %arg5[%c0_11, %c0_12] : memref<1x128xf32, #tpu.memory_space<vmem>>, vector<1x128xf32>
    %12 = vector.broadcast %11 : vector<1x128xf32> to vector<128x128xf32>
    %13 = arith.addf %10, %12 : vector<128x128xf32>
    %cst_13 = arith.constant 0.000000e+00 : f32
    %14 = vector.broadcast %cst_13 : f32 to vector<128x128xf32>
    %15 = arith.maximumf %13, %14 : vector<128x128xf32>
    %16 = arith.truncf %15 : vector<128x128xf32> to vector<128x128xbf16>
    %cst_14 = arith.constant dense<0.000000e+00> : vector<128x128xf32>
    %17 = tpu.matmul %8, %16, %cst_14 {dimension_numbers = #tpu.dot_dimension_numbers<[1], [0], [0], [1], [0, 0, 1, 1], [], []>} : vector<128x128xbf16>, vector<128x128xbf16>, vector<128x128xf32> -> vector<128x128xf32>
    %cst_15 = arith.constant dense<0.000000e+00> : vector<128xf32>
    %18 = vector.multi_reduction <add>, %17, %cst_15 [0] : vector<128x128xf32> to vector<128xf32>
    %19 = vector.shape_cast %18 : vector<128xf32> to vector<1x128xf32>
    %cst_16 = arith.constant 3.125000e-02 : f32
    %20 = vector.broadcast %cst_16 : f32 to vector<1x128xf32>
    %21 = arith.mulf %19, %20 : vector<1x128xf32>
    %22 = arith.mulf %17, %17 : vector<128x128xf32>
    %cst_17 = arith.constant dense<0.000000e+00> : vector<128xf32>
    %23 = vector.multi_reduction <add>, %22, %cst_17 [0] : vector<128x128xf32> to vector<128xf32>
    %24 = vector.shape_cast %23 : vector<128xf32> to vector<1x128xf32>
    %cst_18 = arith.constant 3.125000e-02 : f32
    %25 = vector.broadcast %cst_18 : f32 to vector<1x128xf32>
    %26 = arith.mulf %24, %25 : vector<1x128xf32>
    %27 = arith.mulf %21, %21 : vector<1x128xf32>
    %28 = arith.subf %26, %27 : vector<1x128xf32>
    %cst_19 = arith.constant 0.000000e+00 : f32
    %29 = vector.broadcast %cst_19 : f32 to vector<1x128xf32>
    %30 = arith.maximumf %28, %29 : vector<1x128xf32>
    %cst_20 = arith.constant 9.99999974E-6 : f32
    %31 = vector.broadcast %cst_20 : f32 to vector<1x128xf32>
    %32 = arith.addf %30, %31 : vector<1x128xf32>
    %33 = math.rsqrt %32 : vector<1x128xf32>
    %c0_21 = arith.constant 0 : index
    %c0_22 = arith.constant 0 : index
    %34 = vector.load %arg6[%c0_21, %c0_22] : memref<1x128xf32, #tpu.memory_space<vmem>>, vector<1x128xf32>
    %35 = arith.mulf %33, %34 : vector<1x128xf32>
    %c0_23 = arith.constant 0 : index
    %c0_24 = arith.constant 0 : index
    %36 = vector.load %arg7[%c0_23, %c0_24] : memref<1x128xf32, #tpu.memory_space<vmem>>, vector<1x128xf32>
    %37 = arith.mulf %21, %35 : vector<1x128xf32>
    %38 = arith.subf %36, %37 : vector<1x128xf32>
    %39 = vector.broadcast %35 : vector<1x128xf32> to vector<128x128xf32>
    %40 = arith.mulf %17, %39 : vector<128x128xf32>
    %41 = vector.broadcast %38 : vector<1x128xf32> to vector<128x128xf32>
    %42 = arith.addf %40, %41 : vector<128x128xf32>
    %cst_25 = arith.constant 0.000000e+00 : f32
    %43 = vector.broadcast %cst_25 : f32 to vector<128x128xf32>
    %44 = arith.maximumf %42, %43 : vector<128x128xf32>
    %c0_26 = arith.constant 0 : index
    %c0_27 = arith.constant 0 : index
    %45 = vector.load %arg8[%c0_26, %c0_27] : memref<128x128xf32, #tpu.memory_space<vmem>>, vector<128x128xf32>
    %cst_28 = arith.constant dense<0.000000e+00> : vector<128x128xf32>
    %46 = tpu.matmul %44, %45, %cst_28 {dimension_numbers = #tpu.dot_dimension_numbers<[1], [0], [0], [1], [0, 0, 1, 1], [], []>} : vector<128x128xf32>, vector<128x128xf32>, vector<128x128xf32> -> vector<128x128xf32>
    %c0_29 = arith.constant 0 : index
    %c0_30 = arith.constant 0 : index
    %47 = vector.load %arg9[%c0_29, %c0_30] : memref<1x128xf32, #tpu.memory_space<vmem>>, vector<1x128xf32>
    %48 = vector.broadcast %47 : vector<1x128xf32> to vector<128x128xf32>
    %49 = arith.addf %46, %48 : vector<128x128xf32>
    %cst_31 = arith.constant 0.000000e+00 : f32
    %50 = vector.broadcast %cst_31 : f32 to vector<128x128xf32>
    %51 = arith.maximumf %49, %50 : vector<128x128xf32>
    %52 = arith.truncf %51 : vector<128x128xf32> to vector<128x128xbf16>
    %cst_32 = arith.constant dense<0.000000e+00> : vector<128x128xf32>
    %53 = tpu.matmul %8, %52, %cst_32 {dimension_numbers = #tpu.dot_dimension_numbers<[1], [0], [0], [1], [0, 0, 1, 1], [], []>} : vector<128x128xbf16>, vector<128x128xbf16>, vector<128x128xf32> -> vector<128x128xf32>
    %cst_33 = arith.constant dense<0.000000e+00> : vector<128xf32>
    %54 = vector.multi_reduction <add>, %53, %cst_33 [0] : vector<128x128xf32> to vector<128xf32>
    %55 = vector.shape_cast %54 : vector<128xf32> to vector<1x128xf32>
    %cst_34 = arith.constant 3.125000e-02 : f32
    %56 = vector.broadcast %cst_34 : f32 to vector<1x128xf32>
    %57 = arith.mulf %55, %56 : vector<1x128xf32>
    %58 = arith.mulf %53, %53 : vector<128x128xf32>
    %cst_35 = arith.constant dense<0.000000e+00> : vector<128xf32>
    %59 = vector.multi_reduction <add>, %58, %cst_35 [0] : vector<128x128xf32> to vector<128xf32>
    %60 = vector.shape_cast %59 : vector<128xf32> to vector<1x128xf32>
    %cst_36 = arith.constant 3.125000e-02 : f32
    %61 = vector.broadcast %cst_36 : f32 to vector<1x128xf32>
    %62 = arith.mulf %60, %61 : vector<1x128xf32>
    %63 = arith.mulf %57, %57 : vector<1x128xf32>
    %64 = arith.subf %62, %63 : vector<1x128xf32>
    %cst_37 = arith.constant 0.000000e+00 : f32
    %65 = vector.broadcast %cst_37 : f32 to vector<1x128xf32>
    %66 = arith.maximumf %64, %65 : vector<1x128xf32>
    %cst_38 = arith.constant 9.99999974E-6 : f32
    %67 = vector.broadcast %cst_38 : f32 to vector<1x128xf32>
    %68 = arith.addf %66, %67 : vector<1x128xf32>
    %69 = math.rsqrt %68 : vector<1x128xf32>
    %c0_39 = arith.constant 0 : index
    %c0_40 = arith.constant 0 : index
    %70 = vector.load %arg10[%c0_39, %c0_40] : memref<1x128xf32, #tpu.memory_space<vmem>>, vector<1x128xf32>
    %71 = arith.mulf %69, %70 : vector<1x128xf32>
    %c0_41 = arith.constant 0 : index
    %c0_42 = arith.constant 0 : index
    %72 = vector.load %arg11[%c0_41, %c0_42] : memref<1x128xf32, #tpu.memory_space<vmem>>, vector<1x128xf32>
    %73 = arith.mulf %57, %71 : vector<1x128xf32>
    %74 = arith.subf %72, %73 : vector<1x128xf32>
    %75 = vector.broadcast %71 : vector<1x128xf32> to vector<128x128xf32>
    %76 = arith.mulf %53, %75 : vector<128x128xf32>
    %77 = vector.broadcast %74 : vector<1x128xf32> to vector<128x128xf32>
    %78 = arith.addf %76, %77 : vector<128x128xf32>
    %c0_43 = arith.constant 0 : index
    %c0_44 = arith.constant 0 : index
    %79 = vector.load %arg12[%c0_43, %c0_44] : memref<128x128xf32, #tpu.memory_space<vmem>>, vector<128x128xf32>
    tpu.vector_store %arg12[%c0_43, %c0_44], %78 {strides = array<i32>} : memref<128x128xf32, #tpu.memory_space<vmem>>, vector<128x128xf32>,
    return
  }
}

</mosaic_0001>

<llo_original>
// kernel: mul.1
$region0: #{mul.1}
  #allocation0 [shape = 's32[1]{0}', space=sflag, size = 0x4, scoped, tag = 'scoped memory for mul.1']
  %s0 = inlined_call_operand.vmem [shape: f32[64], index: 0, kind: input, shape index: {}]
  %s1 = inlined_call_operand.vmem [shape: f32[64], index: 1, kind: input, shape index: {}]
  %s2 = inlined_call_operand.vmem [shape: f32[64], index: 2, kind: output, shape index: {}]
  %v3 = vld [vmem:[%s0] sm:$0x1]
  %v4 = vld [vmem:[%s1] sm:$0x1]
  %5 = xla_tuple %v3, %v4
  %6 = xla_tuple %5
  %v7 = vmul.f32 %v3, %v4
  %8 = xla_tuple %v7
  %9 = vst [vmem:[%s2] sm:$0x1] %v7

// kernel: gnn_node_forward.1
$region0: #{gnn_node_forward.1}
  #allocation0 [shape = 'u32[]', space=smem, size = 0x4, offset = 0x4, fixed_abs, tag = 'smem constant byte address 0x4 - core index']
  #allocation1 [shape = 'u32[144,128]{1,0:T(1,128)}', space=vmem, size = 0x12000, scoped, tag = 'internal scratch']
  %s0 = inlined_call_operand.vmem [shape: f32[128,128], index: 0, kind: input, shape index: {}]
  %s1 = inlined_call_operand.vmem [shape: bf16[128,128], index: 1, kind: input, shape index: {}]
  %s2 = inlined_call_operand.vmem [shape: f32[128,128], index: 2, kind: input, shape index: {}]
  %s3 = inlined_call_operand.vmem [shape: f32[1,128], index: 3, kind: input, shape index: {}]
  %s4 = inlined_call_operand.vmem [shape: f32[128,128], index: 4, kind: input, shape index: {}]
  %s5 = inlined_call_operand.vmem [shape: f32[1,128], index: 5, kind: input, shape index: {}]
  %s6 = inlined_call_operand.vmem [shape: f32[1,128], index: 6, kind: input, shape index: {}]
  %s7 = inlined_call_operand.vmem [shape: f32[1,128], index: 7, kind: input, shape index: {}]
  %s8 = inlined_call_operand.vmem [shape: f32[128,128], index: 8, kind: input, shape index: {}]
  %s9 = inlined_call_operand.vmem [shape: f32[1,128], index: 9, kind: input, shape index: {}]
  %s10 = inlined_call_operand.vmem [shape: f32[1,128], index: 10, kind: input, shape index: {}]
  %s11 = inlined_call_operand.vmem [shape: f32[1,128], index: 11, kind: input, shape index: {}]
  %s12 = inlined_call_operand.vmem [shape: f32[128,128], index: 12, kind: output, shape index: {}]
  %s13 = sld [smem:[#allocation0]]
  $region58: #{gnn_node_forward.1} parent=0
    _
  %s15 = ssub.s32 1, %s13
  %s16 = scalar_select 0, %s15, %s13
  // Predicated region
  $region2: #{gnn_node_forward.1} parent=0 // pred_check
    _
  $region3: #{gnn_node_forward.1} parent=0 // pred_check_branch
    %18 = sbr.rel (0) target = $region5
  $region4: #{gnn_node_forward.1} parent=0 // pred_region
    _
  $region5: #{gnn_node_forward.1} parent=0 // pred_fallthru
    _
  // Predicated region
  $region6: #{gnn_node_forward.1} parent=0 // pred_check
    _
  $region7: #{gnn_node_forward.1} parent=0 // pred_check_branch
    %20 = sbr.rel (0) target = $region9
  $region8: #{gnn_node_forward.1} parent=0 // pred_region
    _
  $region9: #{gnn_node_forward.1} parent=0 // pred_fallthru
    _
  // Predicated region
  $region10: #{gnn_node_forward.1} parent=0 // pred_check
    _
  $region11: #{gnn_node_forward.1} parent=0 // pred_check_branch
    %22 = sbr.rel (0) target = $region13
  $region12: #{gnn_node_forward.1} parent=0 // pred_region
    _
  $region13: #{gnn_node_forward.1} parent=0 // pred_fallthru
    _
  // Predicated region
  $region14: #{gnn_node_forward.1} parent=0 // pred_check
    _
  $region15: #{gnn_node_forward.1} parent=0 // pred_check_branch
    %24 = sbr.rel (0) target = $region17
  $region16: #{gnn_node_forward.1} parent=0 // pred_region
    _
  $region17: #{gnn_node_forward.1} parent=0 // pred_fallthru
    _
  // Predicated region
  $region18: #{gnn_node_forward.1} parent=0 // pred_check
    _
  $region19: #{gnn_node_forward.1} parent=0 // pred_check_branch
    %26 = sbr.rel (0) target = $region21
  $region20: #{gnn_node_forward.1} parent=0 // pred_region
    _
  $region21: #{gnn_node_forward.1} parent=0 // pred_fallthru
    _
  // Predicated region
  $region22: #{gnn_node_forward.1} parent=0 // pred_check
    _
  $region23: #{gnn_node_forward.1} parent=0 // pred_check_branch
    %28 = sbr.rel (0) target = $region25
  $region24: #{gnn_node_forward.1} parent=0 // pred_region
    _
  $region25: #{gnn_node_forward.1} parent=0 // pred_fallthru
    _
  // Predicated region
  $region26: #{gnn_node_forward.1} parent=0 // pred_check
    _
  $region27: #{gnn_node_forward.1} parent=0 // pred_check_branch
    %30 = sbr.rel (0) target = $region29
  $region28: #{gnn_node_forward.1} parent=0 // pred_region
    _
  $region29: #{gnn_node_forward.1} parent=0 // pred_fallthru
    _
  // Predicated region
  $region30: #{gnn_node_forward.1} parent=0 // pred_check
    _
  $region31: #{gnn_node_forward.1} parent=0 // pred_check_branch
    %32 = sbr.rel (0) target = $region33
  $region32: #{gnn_node_forward.1} parent=0 // pred_region
    _
  $region33: #{gnn_node_forward.1} parent=0 // pred_fallthru
    _
  // Predicated region
  $region34: #{gnn_node_forward.1} parent=0 // pred_check
    _
  $region35: #{gnn_node_forward.1} parent=0 // pred_check_branch
    %34 = sbr.rel (0) target = $region37
  $region36: #{gnn_node_forward.1} parent=0 // pred_region
    _
  $region37: #{gnn_node_forward.1} parent=0 // pred_fallthru
    _
  // Predicated region
  $region38: #{gnn_node_forward.1} parent=0 // pred_check
    _
  $region39: #{gnn_node_forward.1} parent=0 // pred_check_branch
    %36 = sbr.rel (0) target = $region41
  $region40: #{gnn_node_forward.1} parent=0 // pred_region
    _
  $region41: #{gnn_node_forward.1} parent=0 // pred_fallthru
    _
  // Predicated region
  $region42: #{gnn_node_forward.1} parent=0 // pred_check
    _
  $region43: #{gnn_node_forward.1} parent=0 // pred_check_branch
    %38 = sbr.rel (0) target = $region45
  $region44: #{gnn_node_forward.1} parent=0 // pred_region
    _
  $region45: #{gnn_node_forward.1} parent=0 // pred_fallthru
    _
  // Predicated region
  $region46: #{gnn_node_forward.1} parent=0 // pred_check
    _
  $region47: #{gnn_node_forward.1} parent=0 // pred_check_branch
    %40 = sbr.rel (0) target = $region49
  $region48: #{gnn_node_forward.1} parent=0 // pred_region
    _
  $region49: #{gnn_node_forward.1} parent=0 // pred_fallthru
    _
  %v42 = vld [vmem:[%s0] sm:$0xff]
  %v43 = vld [vmem:[%s0 + $0x8] sm:$0xff]
  %v44 = vld [vmem:[%s0 + $0x10] sm:$0xff]
  %v45 = vld [vmem:[%s0 + $0x18] sm:$0xff]
  %v46 = vld [vmem:[%s0 + $0x20] sm:$0xff]
  %v47 = vld [vmem:[%s0 + $0x28] sm:$0xff]
  %v48 = vld [vmem:[%s0 + $0x30] sm:$0xff]
  %v49 = vld [vmem:[%s0 + $0x38] sm:$0xff]
  %v50 = vld [vmem:[%s0 + $0x40] sm:$0xff]
  %v51 = vld [vmem:[%s0 + $0x48] sm:$0xff]
  %v52 = vld [vmem:[%s0 + $0x50] sm:$0xff]
  %v53 = vld [vmem:[%s0 + $0x58] sm:$0xff]
  %v54 = vld [vmem:[%s0 + $0x60] sm:$0xff]
  %v55 = vld [vmem:[%s0 + $0x68] sm:$0xff]
  %v56 = vld [vmem:[%s0 + $0x70] sm:$0xff]
  %v57 = vld [vmem:[%s0 + $0x78] sm:$0xff]
  %v58 = vld [vmem:[%s2] sm:$0xff]
  %v59 = vld [vmem:[%s2 + $0x8] sm:$0xff]
  %v60 = vld [vmem:[%s2 + $0x10] sm:$0xff]
  %v61 = vld [vmem:[%s2 + $0x18] sm:$0xff]
  %v62 = vld [vmem:[%s2 + $0x20] sm:$0xff]
  %v63 = vld [vmem:[%s2 + $0x28] sm:$0xff]
  %v64 = vld [vmem:[%s2 + $0x30] sm:$0xff]
  %v65 = vld [vmem:[%s2 + $0x38] sm:$0xff]
  %v66 = vld [vmem:[%s2 + $0x40] sm:$0xff]
  %v67 = vld [vmem:[%s2 + $0x48] sm:$0xff]
  %v68 = vld [vmem:[%s2 + $0x50] sm:$0xff]
  %v69 = vld [vmem:[%s2 + $0x58] sm:$0xff]
  %v70 = vld [vmem:[%s2 + $0x60] sm:$0xff]
  %v71 = vld [vmem:[%s2 + $0x68] sm:$0xff]
  %v72 = vld [vmem:[%s2 + $0x70] sm:$0xff]
  %v73 = vld [vmem:[%s2 + $0x78] sm:$0xff]
  %v74 = vld [vmem:[%s3] sm:$0x1]
  %v76 = vlaneseq
  %v77 = vshrl.u32 %v76, 7
  %v78 = vsub.s32 0, %v77
  %v79 = vrot.slane %v74, %v78
  %81 = vmatprep.subr.mxu0 0.0
  %82 = vmatpush1.msra.mxu0 %v58
  %83 = vmatprep.subr.mxu0 0.0
  %84 = vmatpush1.msra.mxu0 %v59
  %85 = vmatprep.subr.mxu0 0.0
  %86 = vmatpush1.msra.mxu0 %v60
  %87 = vmatprep.subr.mxu0 0.0
  %88 = vmatpush1.msra.mxu0 %v61
  %89 = vmatprep.subr.mxu0 0.0
  %90 = vmatpush1.msra.mxu0 %v62
  %91 = vmatprep.subr.mxu0 0.0
  %92 = vmatpush1.msra.mxu0 %v63
  %93 = vmatprep.subr.mxu0 0.0
  %94 = vmatpush1.msra.mxu0 %v64
  %95 = vmatprep.subr.mxu0 0.0
  %96 = vmatpush1.msra.mxu0 %v65
  %97 = vmatprep.subr.mxu0 0.0
  %98 = vmatpush1.msra.mxu0 %v66
  %99 = vmatprep.subr.mxu0 0.0
  %100 = vmatpush1.msra.mxu0 %v67
  %101 = vmatprep.subr.mxu0 0.0
  %102 = vmatpush1.msra.mxu0 %v68
  %103 = vmatprep.subr.mxu0 0.0
  %104 = vmatpush1.msra.mxu0 %v69
  %105 = vmatprep.subr.mxu0 0.0
  %106 = vmatpush1.msra.mxu0 %v70
  %107 = vmatprep.subr.mxu0 0.0
  %108 = vmatpush1.msra.mxu0 %v71
  %109 = vmatprep.subr.mxu0 0.0
  %110 = vmatpush1.msra.mxu0 %v72
  %111 = vmatprep.subr.mxu0 0.0
  %112 = vmatpush1.msra.mxu0 %v73
  %113 = vmatprep.subr.mxu0 0.0
  %114 = vmatpush1.msra.mxu0 0.0
  %115 = vmatprep.subr.mxu0 0.0
  %116 = vmatpush1.msra.mxu0 0.0
  %117 = vmatprep.subr.mxu0 0.0
  %118 = vmatpush1.msra.mxu0 0.0
  %119 = vmatprep.subr.mxu0 0.0
  %120 = vmatpush1.msra.mxu0 0.0
  %121 = vmatprep.subr.mxu0 0.0
  %122 = vmatpush1.msra.mxu0 0.0
  %123 = vmatprep.subr.mxu0 0.0
  %124 = vmatpush1.msra.mxu0 0.0
  %125 = vmatprep.subr.mxu0 0.0
  %126 = vmatpush1.msra.mxu0 0.0
  %127 = vmatprep.subr.mxu0 0.0
  %128 = vmatpush1.msra.mxu0 0.0
  %129 = vmatprep.subr.mxu0 0.0
  %130 = vmatpush1.msra.mxu0 0.0
  %131 = vmatprep.subr.mxu0 0.0
  %132 = vmatpush1.msra.mxu0 0.0
  %133 = vmatprep.subr.mxu0 0.0
  %134 = vmatpush1.msra.mxu0 0.0
  %135 = vmatprep.subr.mxu0 0.0
  %136 = vmatpush1.msra.mxu0 0.0
  %137 = vmatprep.subr.mxu0 0.0
  %138 = vmatpush1.msra.mxu0 0.0
  %139 = vmatprep.subr.mxu0 0.0
  %140 = vmatpush1.msra.mxu0 0.0
  %141 = vmatprep.subr.mxu0 0.0
  %142 = vmatpush1.msra.mxu0 0.0
  %143 = vmatprep.subr.mxu0 0.0
  %144 = vmatpush1.msra.mxu0 0.0
  %145 = vmatprep.mubr.f32.mxu0 0.0
  %146 = vmatmul.mubr.f32.gmra.mrb[0].mxu0 %v42
  %v147 = vpop.f32.mrb[0].mxu0
  %v148 = vadd.f32 %v79, %v147
  %v149 = vpop.f32.mrb[0].mxu0
  %150 = vmatprep.mubr.f32.mxu0 0.0
  %151 = vmatmul.mubr.f32.gmra.mrb[0].mxu0 %v43
  %v152 = vpop.f32.mrb[0].mxu0
  %v153 = vadd.f32 %v79, %v152
  %v154 = vpop.f32.mrb[0].mxu0
  %155 = vmatprep.mubr.f32.mxu0 0.0
  %156 = vmatmul.mubr.f32.gmra.mrb[0].mxu0 %v44
  %v157 = vpop.f32.mrb[0].mxu0
  %v158 = vadd.f32 %v79, %v157
  %v159 = vpop.f32.mrb[0].mxu0
  %160 = vmatprep.mubr.f32.mxu0 0.0
  %161 = vmatmul.mubr.f32.gmra.mrb[0].mxu0 %v45
  %v162 = vpop.f32.mrb[0].mxu0
  %v163 = vadd.f32 %v79, %v162
  %v164 = vpop.f32.mrb[0].mxu0
  %165 = vmatprep.mubr.f32.mxu0 0.0
  %166 = vmatmul.mubr.f32.gmra.mrb[0].mxu0 %v46
  %v167 = vpop.f32.mrb[0].mxu0
  %v168 = vadd.f32 %v79, %v167
  %v169 = vpop.f32.mrb[0].mxu0
  %170 = vmatprep.mubr.f32.mxu0 0.0
  %171 = vmatmul.mubr.f32.gmra.mrb[0].mxu0 %v47
  %v172 = vpop.f32.mrb[0].mxu0
  %v173 = vadd.f32 %v79, %v172
  %v174 = vpop.f32.mrb[0].mxu0
  %175 = vmatprep.mubr.f32.mxu0 0.0
  %176 = vmatmul.mubr.f32.gmra.mrb[0].mxu0 %v48
  %v177 = vpop.f32.mrb[0].mxu0
  %v178 = vadd.f32 %v79, %v177
  %v179 = vpop.f32.mrb[0].mxu0
  %180 = vmatprep.mubr.f32.mxu0 0.0
  %181 = vmatmul.mubr.f32.gmra.mrb[0].mxu0 %v49
  %v182 = vpop.f32.mrb[0].mxu0
  %v183 = vadd.f32 %v79, %v182
  %v184 = vpop.f32.mrb[0].mxu0
  %185 = vmatprep.mubr.f32.mxu0 0.0
  %186 = vmatmul.mubr.f32.gmra.mrb[0].mxu0 %v50
  %v187 = vpop.f32.mrb[0].mxu0
  %v188 = vadd.f32 %v79, %v187
  %v189 = vpop.f32.mrb[0].mxu0
  %190 = vmatprep.mubr.f32.mxu0 0.0
  %191 = vmatmul.mubr.f32.gmra.mrb[0].mxu0 %v51
  %v192 = vpop.f32.mrb[0].mxu0
  %v193 = vadd.f32 %v79, %v192
  %v194 = vpop.f32.mrb[0].mxu0
  %195 = vmatprep.mubr.f32.mxu0 0.0
  %196 = vmatmul.mubr.f32.gmra.mrb[0].mxu0 %v52
  %v197 = vpop.f32.mrb[0].mxu0
  %v198 = vadd.f32 %v79, %v197
  %v199 = vpop.f32.mrb[0].mxu0
  %200 = vmatprep.mubr.f32.mxu0 0.0
  %201 = vmatmul.mubr.f32.gmra.mrb[0].mxu0 %v53
  %v202 = vpop.f32.mrb[0].mxu0
  %v203 = vadd.f32 %v79, %v202
  %v204 = vpop.f32.mrb[0].mxu0
  %205 = vmatprep.mubr.f32.mxu0 0.0
  %206 = vmatmul.mubr.f32.gmra.mrb[0].mxu0 %v54
  %v207 = vpop.f32.mrb[0].mxu0
  %v208 = vadd.f32 %v79, %v207
  %v209 = vpop.f32.mrb[0].mxu0
  %210 = vmatprep.mubr.f32.mxu0 0.0
  %211 = vmatmul.mubr.f32.gmra.mrb[0].mxu0 %v55
  %v212 = vpop.f32.mrb[0].mxu0
  %v213 = vadd.f32 %v79, %v212
  %v214 = vpop.f32.mrb[0].mxu0
  %215 = vmatprep.mubr.f32.mxu0 0.0
  %216 = vmatmul.mubr.f32.gmra.mrb[0].mxu0 %v56
  %v217 = vpop.f32.mrb[0].mxu0
  %v218 = vadd.f32 %v79, %v217
  %v219 = vpop.f32.mrb[0].mxu0
  %220 = vmatprep.mubr.f32.mxu0 0.0
  %221 = vmatmul.mubr.f32.gmra.mrb[0].mxu0 %v57
  %v222 = vpop.f32.mrb[0].mxu0
  %v223 = vadd.f32 %v79, %v222
  %v224 = vpop.f32.mrb[0].mxu0
  %225 = vdwg.mxu0
  %v226 = vmax.f32 %v148, 0.0
  %v227 = vmax.f32 %v153, 0.0
  %v228 = vmax.f32 %v158, 0.0
  %v229 = vmax.f32 %v163, 0.0
  %v230 = vmax.f32 %v168, 0.0
  %v231 = vmax.f32 %v173, 0.0
  %v232 = vmax.f32 %v178, 0.0
  %v233 = vmax.f32 %v183, 0.0
  %v234 = vmax.f32 %v188, 0.0
  %v235 = vmax.f32 %v193, 0.0
  %v236 = vmax.f32 %v198, 0.0
  %v237 = vmax.f32 %v203, 0.0
  %v238 = vmax.f32 %v208, 0.0
  %v239 = vmax.f32 %v213, 0.0
  %v240 = vmax.f32 %v218, 0.0
  %v241 = vmax.f32 %v223, 0.0
  %v242 = vld [vmem:[%s1] sm:$0xf]
  %v243 = vld [vmem:[%s1 + $0x4] sm:$0xf]
  %v244 = vld [vmem:[%s1 + $0x8] sm:$0xf]
  %v245 = vld [vmem:[%s1 + $0xc] sm:$0xf]
  %v246 = vld [vmem:[%s1 + $0x10] sm:$0xf]
  %v247 = vld [vmem:[%s1 + $0x14] sm:$0xf]
  %v248 = vld [vmem:[%s1 + $0x18] sm:$0xf]
  %v249 = vld [vmem:[%s1 + $0x1c] sm:$0xf]
  %v250 = vld [vmem:[%s1 + $0x20] sm:$0xf]
  %v251 = vld [vmem:[%s1 + $0x24] sm:$0xf]
  %v252 = vld [vmem:[%s1 + $0x28] sm:$0xf]
  %v253 = vld [vmem:[%s1 + $0x2c] sm:$0xf]
  %v254 = vld [vmem:[%s1 + $0x30] sm:$0xf]
  %v255 = vld [vmem:[%s1 + $0x34] sm:$0xf]
  %v256 = vld [vmem:[%s1 + $0x38] sm:$0xf]
  %v257 = vld [vmem:[%s1 + $0x3c] sm:$0xf]
  %v258 = vld [vmem:[%s4] sm:$0xff]
  %v259 = vld [vmem:[%s4 + $0x8] sm:$0xff]
  %v260 = vld [vmem:[%s4 + $0x10] sm:$0xff]
  %v261 = vld [vmem:[%s4 + $0x18] sm:$0xff]
  %v262 = vld [vmem:[%s4 + $0x20] sm:$0xff]
  %v263 = vld [vmem:[%s4 + $0x28] sm:$0xff]
  %v264 = vld [vmem:[%s4 + $0x30] sm:$0xff]
  %v265 = vld [vmem:[%s4 + $0x38] sm:$0xff]
  %v266 = vld [vmem:[%s4 + $0x40] sm:$0xff]
  %v267 = vld [vmem:[%s4 + $0x48] sm:$0xff]
  %v268 = vld [vmem:[%s4 + $0x50] sm:$0xff]
  %v269 = vld [vmem:[%s4 + $0x58] sm:$0xff]
  %v270 = vld [vmem:[%s4 + $0x60] sm:$0xff]
  %v271 = vld [vmem:[%s4 + $0x68] sm:$0xff]
  %v272 = vld [vmem:[%s4 + $0x70] sm:$0xff]
  %v273 = vld [vmem:[%s4 + $0x78] sm:$0xff]
  %v274 = vld [vmem:[%s5] sm:$0x1]
  %v276 = vlaneseq
  %v277 = vshrl.u32 %v276, 7
  %v278 = vsub.s32 0, %v277
  %v279 = vrot.slane %v274, %v278
  %281 = vmatprep.subr.mxu0 0.0
  %282 = vmatpush1.msra.mxu0 %v258
  %283 = vmatprep.subr.mxu0 0.0
  %284 = vmatpush1.msra.mxu0 %v259
  %285 = vmatprep.subr.mxu0 0.0
  %286 = vmatpush1.msra.mxu0 %v260
  %287 = vmatprep.subr.mxu0 0.0
  %288 = vmatpush1.msra.mxu0 %v261
  %289 = vmatprep.subr.mxu0 0.0
  %290 = vmatpush1.msra.mxu0 %v262
  %291 = vmatprep.subr.mxu0 0.0
  %292 = vmatpush1.msra.mxu0 %v263
  %293 = vmatprep.subr.mxu0 0.0
  %294 = vmatpush1.msra.mxu0 %v264
  %295 = vmatprep.subr.mxu0 0.0
  %296 = vmatpush1.msra.mxu0 %v265
  %297 = vmatprep.subr.mxu0 0.0
  %298 = vmatpush1.msra.mxu0 %v266
  %299 = vmatprep.subr.mxu0 0.0
  %300 = vmatpush1.msra.mxu0 %v267
  %301 = vmatprep.subr.mxu0 0.0
  %302 = vmatpush1.msra.mxu0 %v268
  %303 = vmatprep.subr.mxu0 0.0
  %304 = vmatpush1.msra.mxu0 %v269
  %305 = vmatprep.subr.mxu0 0.0
  %306 = vmatpush1.msra.mxu0 %v270
  %307 = vmatprep.subr.mxu0 0.0
  %308 = vmatpush1.msra.mxu0 %v271
  %309 = vmatprep.subr.mxu0 0.0
  %310 = vmatpush1.msra.mxu0 %v272
  %311 = vmatprep.subr.mxu0 0.0
  %312 = vmatpush1.msra.mxu0 %v273
  %313 = vmatprep.subr.mxu0 0.0
  %314 = vmatpush1.msra.mxu0 0.0
  %315 = vmatprep.subr.mxu0 0.0
  %316 = vmatpush1.msra.mxu0 0.0
  %317 = vmatprep.subr.mxu0 0.0
  %318 = vmatpush1.msra.mxu0 0.0
  %319 = vmatprep.subr.mxu0 0.0
  %320 = vmatpush1.msra.mxu0 0.0
  %321 = vmatprep.subr.mxu0 0.0
  %322 = vmatpush1.msra.mxu0 0.0
  %323 = vmatprep.subr.mxu0 0.0
  %324 = vmatpush1.msra.mxu0 0.0
  %325 = vmatprep.subr.mxu0 0.0
  %326 = vmatpush1.msra.mxu0 0.0
  %327 = vmatprep.subr.mxu0 0.0
  %328 = vmatpush1.msra.mxu0 0.0
  %329 = vmatprep.subr.mxu0 0.0
  %330 = vmatpush1.msra.mxu0 0.0
  %331 = vmatprep.subr.mxu0 0.0
  %332 = vmatpush1.msra.mxu0 0.0
  %333 = vmatprep.subr.mxu0 0.0
  %334 = vmatpush1.msra.mxu0 0.0
  %335 = vmatprep.subr.mxu0 0.0
  %336 = vmatpush1.msra.mxu0 0.0
  %337 = vmatprep.subr.mxu0 0.0
  %338 = vmatpush1.msra.mxu0 0.0
  %339 = vmatprep.subr.mxu0 0.0
  %340 = vmatpush1.msra.mxu0 0.0
  %341 = vmatprep.subr.mxu0 0.0
  %342 = vmatpush1.msra.mxu0 0.0
  %343 = vmatprep.subr.mxu0 0.0
  %344 = vmatpush1.msra.mxu0 0.0
  %345 = vmatprep.mubr.f32.mxu0 0.0
  %346 = vmatmul.mubr.f32.gmra.mrb[0].mxu0 %v226
  %v347 = vpop.f32.mrb[0].mxu0
  %v348 = vadd.f32 %v279, %v347
  %v349 = vpop.f32.mrb[0].mxu0
  %350 = vmatprep.mubr.f32.mxu0 0.0
  %351 = vmatmul.mubr.f32.gmra.mrb[0].mxu0 %v227
  %v352 = vpop.f32.mrb[0].mxu0
  %v353 = vadd.f32 %v279, %v352
  %v354 = vpop.f32.mrb[0].mxu0
  %355 = vmatprep.mubr.f32.mxu0 0.0
  %356 = vmatmul.mubr.f32.gmra.mrb[0].mxu0 %v228
  %v357 = vpop.f32.mrb[0].mxu0
  %v358 = vadd.f32 %v279, %v357
  %v359 = vpop.f32.mrb[0].mxu0
  %360 = vmatprep.mubr.f32.mxu0 0.0
  %361 = vmatmul.mubr.f32.gmra.mrb[0].mxu0 %v229
  %v362 = vpop.f32.mrb[0].mxu0
  %v363 = vadd.f32 %v279, %v362
  %v364 = vpop.f32.mrb[0].mxu0
  %365 = vmatprep.mubr.f32.mxu0 0.0
  %366 = vmatmul.mubr.f32.gmra.mrb[0].mxu0 %v230
  %v367 = vpop.f32.mrb[0].mxu0
  %v368 = vadd.f32 %v279, %v367
  %v369 = vpop.f32.mrb[0].mxu0
  %370 = vmatprep.mubr.f32.mxu0 0.0
  %371 = vmatmul.mubr.f32.gmra.mrb[0].mxu0 %v231
  %v372 = vpop.f32.mrb[0].mxu0
  %v373 = vadd.f32 %v279, %v372
  %v374 = vpop.f32.mrb[0].mxu0
  %375 = vmatprep.mubr.f32.mxu0 0.0
  %376 = vmatmul.mubr.f32.gmra.mrb[0].mxu0 %v232
  %v377 = vpop.f32.mrb[0].mxu0
  %v378 = vadd.f32 %v279, %v377
  %v379 = vpop.f32.mrb[0].mxu0
  %380 = vmatprep.mubr.f32.mxu0 0.0
  %381 = vmatmul.mubr.f32.gmra.mrb[0].mxu0 %v233
  %v382 = vpop.f32.mrb[0].mxu0
  %v383 = vadd.f32 %v279, %v382
  %v384 = vpop.f32.mrb[0].mxu0
  %385 = vmatprep.mubr.f32.mxu0 0.0
  %386 = vmatmul.mubr.f32.gmra.mrb[0].mxu0 %v234
  %v387 = vpop.f32.mrb[0].mxu0
  %v388 = vadd.f32 %v279, %v387
  %v389 = vpop.f32.mrb[0].mxu0
  %390 = vmatprep.mubr.f32.mxu0 0.0
  %391 = vmatmul.mubr.f32.gmra.mrb[0].mxu0 %v235
  %v392 = vpop.f32.mrb[0].mxu0
  %v393 = vadd.f32 %v279, %v392
  %v394 = vpop.f32.mrb[0].mxu0
  %395 = vmatprep.mubr.f32.mxu0 0.0
  %396 = vmatmul.mubr.f32.gmra.mrb[0].mxu0 %v236
  %v397 = vpop.f32.mrb[0].mxu0
  %v398 = vadd.f32 %v279, %v397
  %v399 = vpop.f32.mrb[0].mxu0
  %400 = vmatprep.mubr.f32.mxu0 0.0
  %401 = vmatmul.mubr.f32.gmra.mrb[0].mxu0 %v237
  %v402 = vpop.f32.mrb[0].mxu0
  %v403 = vadd.f32 %v279, %v402
  %v404 = vpop.f32.mrb[0].mxu0
  %405 = vmatprep.mubr.f32.mxu0 0.0
  %406 = vmatmul.mubr.f32.gmra.mrb[0].mxu0 %v238
  %v407 = vpop.f32.mrb[0].mxu0
  %v408 = vadd.f32 %v279, %v407
  %v409 = vpop.f32.mrb[0].mxu0
  %410 = vmatprep.mubr.f32.mxu0 0.0
  %411 = vmatmul.mubr.f32.gmra.mrb[0].mxu0 %v239
  %v412 = vpop.f32.mrb[0].mxu0
  %v413 = vadd.f32 %v279, %v412
  %v414 = vpop.f32.mrb[0].mxu0
  %415 = vmatprep.mubr.f32.mxu0 0.0
  %416 = vmatmul.mubr.f32.gmra.mrb[0].mxu0 %v240
  %v417 = vpop.f32.mrb[0].mxu0
  %v418 = vadd.f32 %v279, %v417
  %v419 = vpop.f32.mrb[0].mxu0
  %420 = vmatprep.mubr.f32.mxu0 0.0
  %421 = vmatmul.mubr.f32.gmra.mrb[0].mxu0 %v241
  %v422 = vpop.f32.mrb[0].mxu0
  %v423 = vadd.f32 %v279, %v422
  %v424 = vpop.f32.mrb[0].mxu0
  %425 = vdwg.mxu0
  %v426 = vmax.f32 %v348, 0.0
  %v427 = vmax.f32 %v353, 0.0
  %v428 = vmax.f32 %v358, 0.0
  %v429 = vmax.f32 %v363, 0.0
  %v430 = vmax.f32 %v368, 0.0
  %v431 = vmax.f32 %v373, 0.0
  %v432 = vmax.f32 %v378, 0.0
  %v433 = vmax.f32 %v383, 0.0
  %v434 = vmax.f32 %v388, 0.0
  %v435 = vmax.f32 %v393, 0.0
  %v436 = vmax.f32 %v398, 0.0
  %v437 = vmax.f32 %v403, 0.0
  %v438 = vmax.f32 %v408, 0.0
  %v439 = vmax.f32 %v413, 0.0
  %v440 = vmax.f32 %v418, 0.0
  %v441 = vmax.f32 %v423, 0.0
  %v442 = vpack.c.bf16 %v427, %v426
  %v443 = vpack.c.bf16 %v429, %v428
  %v444 = vpack.c.bf16 %v431, %v430
  %v445 = vpack.c.bf16 %v433, %v432
  %v446 = vpack.c.bf16 %v435, %v434
  %v447 = vpack.c.bf16 %v437, %v436
  %v448 = vpack.c.bf16 %v439, %v438
  %v449 = vpack.c.bf16 %v441, %v440
  %v466 = vunpack.c.l.b16 %v242
  %v467 = vunpack.c.l.b16 %v243
  %v468 = vunpack.c.l.b16 %v244
  %v469 = vunpack.c.l.b16 %v245
  %v470 = vunpack.c.l.b16 %v246
  %v471 = vunpack.c.l.b16 %v247
  %v472 = vunpack.c.l.b16 %v248
  %v473 = vunpack.c.l.b16 %v249
  %v474 = vunpack.c.l.b16 %v250
  %v475 = vunpack.c.l.b16 %v251
  %v476 = vunpack.c.l.b16 %v252
  %v477 = vunpack.c.l.b16 %v253
  %v478 = vunpack.c.l.b16 %v254
  %v479 = vunpack.c.l.b16 %v255
  %v480 = vunpack.c.l.b16 %v256
  %v481 = vunpack.c.l.b16 %v257
  %v482 = vpack.c.b16 %v467, %v466
  %v483 = vpack.c.b16 %v469, %v468
  %v484 = vpack.c.b16 %v471, %v470
  %v485 = vpack.c.b16 %v473, %v472
  %v486 = vpack.c.b16 %v475, %v474
  %v487 = vpack.c.b16 %v477, %v476
  %v488 = vpack.c.b16 %v479, %v478
  %v489 = vpack.c.b16 %v481, %v480
  %498 = vmatprep.subr.bf16.mxu0 0
  %499 = vmatpush1.bf16.msra.mxu0 %v442
  %500 = vmatprep.subr.bf16.mxu0 0
  %501 = vmatpush1.bf16.msra.mxu0 %v443
  %502 = vmatprep.subr.bf16.mxu0 0
  %503 = vmatpush1.bf16.msra.mxu0 %v444
  %504 = vmatprep.subr.bf16.mxu0 0
  %505 = vmatpush1.bf16.msra.mxu0 %v445
  %506 = vmatprep.subr.bf16.mxu0 0
  %507 = vmatpush1.bf16.msra.mxu0 %v446
  %508 = vmatprep.subr.bf16.mxu0 0
  %509 = vmatpush1.bf16.msra.mxu0 %v447
  %510 = vmatprep.subr.bf16.mxu0 0
  %511 = vmatpush1.bf16.msra.mxu0 %v448
  %512 = vmatprep.subr.bf16.mxu0 0
  %513 = vmatpush1.bf16.msra.mxu0 %v449
  %514 = vmatprep.subr.bf16.mxu0 0
  %515 = vmatpush1.bf16.msra.mxu0 0
  %516 = vmatprep.subr.bf16.mxu0 0
  %517 = vmatpush1.bf16.msra.mxu0 0
  %518 = vmatprep.subr.bf16.mxu0 0
  %519 = vmatpush1.bf16.msra.mxu0 0
  %520 = vmatprep.subr.bf16.mxu0 0
  %521 = vmatpush1.bf16.msra.mxu0 0
  %522 = vmatprep.subr.bf16.mxu0 0
  %523 = vmatpush1.bf16.msra.mxu0 0
  %524 = vmatprep.subr.bf16.mxu0 0
  %525 = vmatpush1.bf16.msra.mxu0 0
  %526 = vmatprep.subr.bf16.mxu0 0
  %527 = vmatpush1.bf16.msra.mxu0 0
  %528 = vmatprep.subr.bf16.mxu0 0
  %529 = vmatpush1.bf16.msra.mxu0 0
  %530 = vmatprep.mubr.bf16.mxu0 0
  %531 = vmatmul.mubr.bf16.gmra.mrb[0].mxu0 %v482
  %v532 = vpop.f32.mrb[0].mxu0
  %v533 = vadd.f32 0.0, %v532
  %v534 = vpop.f32.mrb[0].mxu0
  %v535 = vpop.f32.mrb[0].mxu0
  %v536 = vadd.f32 0.0, %v535
  %v537 = vpop.f32.mrb[0].mxu0
  %538 = vmatprep.mubr.bf16.mxu0 0
  %539 = vmatmul.mubr.bf16.gmra.mrb[0].mxu0 %v483
  %v540 = vpop.f32.mrb[0].mxu0
  %v541 = vadd.f32 0.0, %v540
  %v542 = vpop.f32.mrb[0].mxu0
  %v543 = vpop.f32.mrb[0].mxu0
  %v544 = vadd.f32 0.0, %v543
  %v545 = vpop.f32.mrb[0].mxu0
  %546 = vmatprep.mubr.bf16.mxu0 0
  %547 = vmatmul.mubr.bf16.gmra.mrb[0].mxu0 %v484
  %v548 = vpop.f32.mrb[0].mxu0
  %v549 = vadd.f32 0.0, %v548
  %v550 = vpop.f32.mrb[0].mxu0
  %v551 = vpop.f32.mrb[0].mxu0
  %v552 = vadd.f32 0.0, %v551
  %v553 = vpop.f32.mrb[0].mxu0
  %554 = vmatprep.mubr.bf16.mxu0 0
  %555 = vmatmul.mubr.bf16.gmra.mrb[0].mxu0 %v485
  %v556 = vpop.f32.mrb[0].mxu0
  %v557 = vadd.f32 0.0, %v556
  %v558 = vpop.f32.mrb[0].mxu0
  %v559 = vpop.f32.mrb[0].mxu0
  %v560 = vadd.f32 0.0, %v559
  %v561 = vpop.f32.mrb[0].mxu0
  %562 = vmatprep.mubr.bf16.mxu0 0
  %563 = vmatmul.mubr.bf16.gmra.mrb[0].mxu0 %v486
  %v564 = vpop.f32.mrb[0].mxu0
  %v565 = vadd.f32 0.0, %v564
  %v566 = vpop.f32.mrb[0].mxu0
  %v567 = vpop.f32.mrb[0].mxu0
  %v568 = vadd.f32 0.0, %v567
  %v569 = vpop.f32.mrb[0].mxu0
  %570 = vmatprep.mubr.bf16.mxu0 0
  %571 = vmatmul.mubr.bf16.gmra.mrb[0].mxu0 %v487
  %v572 = vpop.f32.mrb[0].mxu0
  %v573 = vadd.f32 0.0, %v572
  %v574 = vpop.f32.mrb[0].mxu0
  %v575 = vpop.f32.mrb[0].mxu0
  %v576 = vadd.f32 0.0, %v575
  %v577 = vpop.f32.mrb[0].mxu0
  %578 = vmatprep.mubr.bf16.mxu0 0
  %579 = vmatmul.mubr.bf16.gmra.mrb[0].mxu0 %v488
  %v580 = vpop.f32.mrb[0].mxu0
  %v581 = vadd.f32 0.0, %v580
  %v582 = vpop.f32.mrb[0].mxu0
  %v583 = vpop.f32.mrb[0].mxu0
  %v584 = vadd.f32 0.0, %v583
  %v585 = vpop.f32.mrb[0].mxu0
  %586 = vmatprep.mubr.bf16.mxu0 0
  %587 = vmatmul.mubr.bf16.gmra.mrb[0].mxu0 %v489
  %v588 = vpop.f32.mrb[0].mxu0
  %v589 = vadd.f32 0.0, %v588
  %v590 = vpop.f32.mrb[0].mxu0
  %v591 = vpop.f32.mrb[0].mxu0
  %v592 = vadd.f32 0.0, %v591
  %v593 = vpop.f32.mrb[0].mxu0
  %594 = vdwg.mxu0
  %v595 = vadd.f32 %v533, %v536
  %v596 = vadd.f32 %v595, %v541
  %v597 = vadd.f32 %v596, %v544
  %v598 = vadd.f32 %v597, %v549
  %v599 = vadd.f32 %v598, %v552
  %v600 = vadd.f32 %v599, %v557
  %v601 = vadd.f32 %v600, %v560
  %v602 = vadd.f32 %v601, %v565
  %v603 = vadd.f32 %v602, %v568
  %v604 = vadd.f32 %v603, %v573
  %v605 = vadd.f32 %v604, %v576
  %v606 = vadd.f32 %v605, %v581
  %v607 = vadd.f32 %v606, %v584
  %v608 = vadd.f32 %v607, %v589
  %v609 = vadd.f32 %v608, %v592
  %v610 = vrot.slane %v609, 4
  %v611 = vadd.f32 %v609, %v610
  %v612 = vrot.slane %v611, 2
  %v613 = vadd.f32 %v611, %v612
  %v614 = vrot.slane %v613, 1
  %v615 = vadd.f32 %v613, %v614
  %v616 = vmul.f32 %v615, 0.03125
  %v617 = vmul.f32 %v533, %v533
  %v618 = vmul.f32 %v536, %v536
  %v619 = vmul.f32 %v541, %v541
  %v620 = vmul.f32 %v544, %v544
  %v621 = vmul.f32 %v549, %v549
  %v622 = vmul.f32 %v552, %v552
  %v623 = vmul.f32 %v557, %v557
  %v624 = vmul.f32 %v560, %v560
  %v625 = vmul.f32 %v565, %v565
  %v626 = vmul.f32 %v568, %v568
  %v627 = vmul.f32 %v573, %v573
  %v628 = vmul.f32 %v576, %v576
  %v629 = vmul.f32 %v581, %v581
  %v630 = vmul.f32 %v584, %v584
  %v631 = vmul.f32 %v589, %v589
  %v632 = vmul.f32 %v592, %v592
  %v633 = vadd.f32 %v617, %v618
  %v634 = vadd.f32 %v633, %v619
  %v635 = vadd.f32 %v634, %v620
  %v636 = vadd.f32 %v635, %v621
  %v637 = vadd.f32 %v636, %v622
  %v638 = vadd.f32 %v637, %v623
  %v639 = vadd.f32 %v638, %v624
  %v640 = vadd.f32 %v639, %v625
  %v641 = vadd.f32 %v640, %v626
  %v642 = vadd.f32 %v641, %v627
  %v643 = vadd.f32 %v642, %v628
  %v644 = vadd.f32 %v643, %v629
  %v645 = vadd.f32 %v644, %v630
  %v646 = vadd.f32 %v645, %v631
  %v647 = vadd.f32 %v646, %v632
  %v648 = vrot.slane %v647, 4
  %v649 = vadd.f32 %v647, %v648
  %v650 = vrot.slane %v649, 2
  %v651 = vadd.f32 %v649, %v650
  %v652 = vrot.slane %v651, 1
  %v653 = vadd.f32 %v651, %v652
  %v654 = vmul.f32 %v653, 0.03125
  %v655 = vmul.f32 %v616, %v616
  %v656 = vsub.f32 %v654, %v655
  %v657 = vmax.f32 %v656, 0.0
  %v658 = vadd.f32 %v657, 1e-05
  %v659 = vrsqrt.pop %v658
  %v660 = vld [vmem:[%s6] sm:$0x1]
  %v661 = vmul.f32 %v659, %v660
  %v662 = vld [vmem:[%s7] sm:$0x1]
  %v663 = vmul.f32 %v616, %v661
  %v664 = vsub.f32 %v662, %v663
  %v665 = vlaneseq
  %v666 = vshrl.u32 %v665, 7
  %v667 = vsub.s32 0, %v666
  %v668 = vrot.slane %v661, %v667
  %v669 = vmul.f32 %v533, %v668
  %v670 = vmul.f32 %v536, %v668
  %v671 = vmul.f32 %v541, %v668
  %v672 = vmul.f32 %v544, %v668
  %v673 = vmul.f32 %v549, %v668
  %v674 = vmul.f32 %v552, %v668
  %v675 = vmul.f32 %v557, %v668
  %v676 = vmul.f32 %v560, %v668
  %v677 = vmul.f32 %v565, %v668
  %v678 = vmul.f32 %v568, %v668
  %v679 = vmul.f32 %v573, %v668
  %v680 = vmul.f32 %v576, %v668
  %v681 = vmul.f32 %v581, %v668
  %v682 = vmul.f32 %v584, %v668
  %v683 = vmul.f32 %v589, %v668
  %v684 = vmul.f32 %v592, %v668
  %v686 = vlaneseq
  %v687 = vshrl.u32 %v686, 7
  %v688 = vsub.s32 0, %v687
  %v689 = vrot.slane %v664, %v688
  %v691 = vadd.f32 %v669, %v689
  %v692 = vadd.f32 %v670, %v689
  %v693 = vadd.f32 %v671, %v689
  %v694 = vadd.f32 %v672, %v689
  %v695 = vadd.f32 %v673, %v689
  %v696 = vadd.f32 %v674, %v689
  %v697 = vadd.f32 %v675, %v689
  %v698 = vadd.f32 %v676, %v689
  %v699 = vadd.f32 %v677, %v689
  %v700 = vadd.f32 %v678, %v689
  %v701 = vadd.f32 %v679, %v689
  %v702 = vadd.f32 %v680, %v689
  %v703 = vadd.f32 %v681, %v689
  %v704 = vadd.f32 %v682, %v689
  %v705 = vadd.f32 %v683, %v689
  %v706 = vadd.f32 %v684, %v689
  %v707 = vmax.f32 %v691, 0.0
  %v708 = vmax.f32 %v692, 0.0
  %v709 = vmax.f32 %v693, 0.0
  %v710 = vmax.f32 %v694, 0.0
  %v711 = vmax.f32 %v695, 0.0
  %v712 = vmax.f32 %v696, 0.0
  %v713 = vmax.f32 %v697, 0.0
  %v714 = vmax.f32 %v698, 0.0
  %v715 = vmax.f32 %v699, 0.0
  %v716 = vmax.f32 %v700, 0.0
  %v717 = vmax.f32 %v701, 0.0
  %v718 = vmax.f32 %v702, 0.0
  %v719 = vmax.f32 %v703, 0.0
  %v720 = vmax.f32 %v704, 0.0
  %v721 = vmax.f32 %v705, 0.0
  %v722 = vmax.f32 %v706, 0.0
  %v723 = vld [vmem:[%s8] sm:$0xff]
  %v724 = vld [vmem:[%s8 + $0x8] sm:$0xff]
  %v725 = vld [vmem:[%s8 + $0x10] sm:$0xff]
  %v726 = vld [vmem:[%s8 + $0x18] sm:$0xff]
  %v727 = vld [vmem:[%s8 + $0x20] sm:$0xff]
  %v728 = vld [vmem:[%s8 + $0x28] sm:$0xff]
  %v729 = vld [vmem:[%s8 + $0x30] sm:$0xff]
  %v730 = vld [vmem:[%s8 + $0x38] sm:$0xff]
  %v731 = vld [vmem:[%s8 + $0x40] sm:$0xff]
  %v732 = vld [vmem:[%s8 + $0x48] sm:$0xff]
  %v733 = vld [vmem:[%s8 + $0x50] sm:$0xff]
  %v734 = vld [vmem:[%s8 + $0x58] sm:$0xff]
  %v735 = vld [vmem:[%s8 + $0x60] sm:$0xff]
  %v736 = vld [vmem:[%s8 + $0x68] sm:$0xff]
  %v737 = vld [vmem:[%s8 + $0x70] sm:$0xff]
  %v738 = vld [vmem:[%s8 + $0x78] sm:$0xff]
  %v739 = vld [vmem:[%s9] sm:$0x1]
  %v741 = vlaneseq
  %v742 = vshrl.u32 %v741, 7
  %v743 = vsub.s32 0, %v742
  %v744 = vrot.slane %v739, %v743
  %746 = vmatprep.subr.mxu0 0.0
  %747 = vmatpush1.msra.mxu0 %v723
  %748 = vmatprep.subr.mxu0 0.0
  %749 = vmatpush1.msra.mxu0 %v724
  %750 = vmatprep.subr.mxu0 0.0
  %751 = vmatpush1.msra.mxu0 %v725
  %752 = vmatprep.subr.mxu0 0.0
  %753 = vmatpush1.msra.mxu0 %v726
  %754 = vmatprep.subr.mxu0 0.0
  %755 = vmatpush1.msra.mxu0 %v727
  %756 = vmatprep.subr.mxu0 0.0
  %757 = vmatpush1.msra.mxu0 %v728
  %758 = vmatprep.subr.mxu0 0.0
  %759 = vmatpush1.msra.mxu0 %v729
  %760 = vmatprep.subr.mxu0 0.0
  %761 = vmatpush1.msra.mxu0 %v730
  %762 = vmatprep.subr.mxu0 0.0
  %763 = vmatpush1.msra.mxu0 %v731
  %764 = vmatprep.subr.mxu0 0.0
  %765 = vmatpush1.msra.mxu0 %v732
  %766 = vmatprep.subr.mxu0 0.0
  %767 = vmatpush1.msra.mxu0 %v733
  %768 = vmatprep.subr.mxu0 0.0
  %769 = vmatpush1.msra.mxu0 %v734
  %770 = vmatprep.subr.mxu0 0.0
  %771 = vmatpush1.msra.mxu0 %v735
  %772 = vmatprep.subr.mxu0 0.0
  %773 = vmatpush1.msra.mxu0 %v736
  %774 = vmatprep.subr.mxu0 0.0
  %775 = vmatpush1.msra.mxu0 %v737
  %776 = vmatprep.subr.mxu0 0.0
  %777 = vmatpush1.msra.mxu0 %v738
  %778 = vmatprep.subr.mxu0 0.0
  %779 = vmatpush1.msra.mxu0 0.0
  %780 = vmatprep.subr.mxu0 0.0
  %781 = vmatpush1.msra.mxu0 0.0
  %782 = vmatprep.subr.mxu0 0.0
  %783 = vmatpush1.msra.mxu0 0.0
  %784 = vmatprep.subr.mxu0 0.0
  %785 = vmatpush1.msra.mxu0 0.0
  %786 = vmatprep.subr.mxu0 0.0
  %787 = vmatpush1.msra.mxu0 0.0
  %788 = vmatprep.subr.mxu0 0.0
  %789 = vmatpush1.msra.mxu0 0.0
  %790 = vmatprep.subr.mxu0 0.0
  %791 = vmatpush1.msra.mxu0 0.0
  %792 = vmatprep.subr.mxu0 0.0
  %793 = vmatpush1.msra.mxu0 0.0
  %794 = vmatprep.subr.mxu0 0.0
  %795 = vmatpush1.msra.mxu0 0.0
  %796 = vmatprep.subr.mxu0 0.0
  %797 = vmatpush1.msra.mxu0 0.0
  %798 = vmatprep.subr.mxu0 0.0
  %799 = vmatpush1.msra.mxu0 0.0
  %800 = vmatprep.subr.mxu0 0.0
  %801 = vmatpush1.msra.mxu0 0.0
  %802 = vmatprep.subr.mxu0 0.0
  %803 = vmatpush1.msra.mxu0 0.0
  %804 = vmatprep.subr.mxu0 0.0
  %805 = vmatpush1.msra.mxu0 0.0
  %806 = vmatprep.subr.mxu0 0.0
  %807 = vmatpush1.msra.mxu0 0.0
  %808 = vmatprep.subr.mxu0 0.0
  %809 = vmatpush1.msra.mxu0 0.0
  %810 = vmatprep.mubr.f32.mxu0 0.0
  %811 = vmatmul.mubr.f32.gmra.mrb[0].mxu0 %v707
  %v812 = vpop.f32.mrb[0].mxu0
  %v813 = vadd.f32 %v744, %v812
  %v814 = vpop.f32.mrb[0].mxu0
  %815 = vmatprep.mubr.f32.mxu0 0.0
  %816 = vmatmul.mubr.f32.gmra.mrb[0].mxu0 %v708
  %v817 = vpop.f32.mrb[0].mxu0
  %v818 = vadd.f32 %v744, %v817
  %v819 = vpop.f32.mrb[0].mxu0
  %820 = vmatprep.mubr.f32.mxu0 0.0
  %821 = vmatmul.mubr.f32.gmra.mrb[0].mxu0 %v709
  %v822 = vpop.f32.mrb[0].mxu0
  %v823 = vadd.f32 %v744, %v822
  %v824 = vpop.f32.mrb[0].mxu0
  %825 = vmatprep.mubr.f32.mxu0 0.0
  %826 = vmatmul.mubr.f32.gmra.mrb[0].mxu0 %v710
  %v827 = vpop.f32.mrb[0].mxu0
  %v828 = vadd.f32 %v744, %v827
  %v829 = vpop.f32.mrb[0].mxu0
  %830 = vmatprep.mubr.f32.mxu0 0.0
  %831 = vmatmul.mubr.f32.gmra.mrb[0].mxu0 %v711
  %v832 = vpop.f32.mrb[0].mxu0
  %v833 = vadd.f32 %v744, %v832
  %v834 = vpop.f32.mrb[0].mxu0
  %835 = vmatprep.mubr.f32.mxu0 0.0
  %836 = vmatmul.mubr.f32.gmra.mrb[0].mxu0 %v712
  %v837 = vpop.f32.mrb[0].mxu0
  %v838 = vadd.f32 %v744, %v837
  %v839 = vpop.f32.mrb[0].mxu0
  %840 = vmatprep.mubr.f32.mxu0 0.0
  %841 = vmatmul.mubr.f32.gmra.mrb[0].mxu0 %v713
  %v842 = vpop.f32.mrb[0].mxu0
  %v843 = vadd.f32 %v744, %v842
  %v844 = vpop.f32.mrb[0].mxu0
  %845 = vmatprep.mubr.f32.mxu0 0.0
  %846 = vmatmul.mubr.f32.gmra.mrb[0].mxu0 %v714
  %v847 = vpop.f32.mrb[0].mxu0
  %v848 = vadd.f32 %v744, %v847
  %v849 = vpop.f32.mrb[0].mxu0
  %850 = vmatprep.mubr.f32.mxu0 0.0
  %851 = vmatmul.mubr.f32.gmra.mrb[0].mxu0 %v715
  %v852 = vpop.f32.mrb[0].mxu0
  %v853 = vadd.f32 %v744, %v852
  %v854 = vpop.f32.mrb[0].mxu0
  %855 = vmatprep.mubr.f32.mxu0 0.0
  %856 = vmatmul.mubr.f32.gmra.mrb[0].mxu0 %v716
  %v857 = vpop.f32.mrb[0].mxu0
  %v858 = vadd.f32 %v744, %v857
  %v859 = vpop.f32.mrb[0].mxu0
  %860 = vmatprep.mubr.f32.mxu0 0.0
  %861 = vmatmul.mubr.f32.gmra.mrb[0].mxu0 %v717
  %v862 = vpop.f32.mrb[0].mxu0
  %v863 = vadd.f32 %v744, %v862
  %v864 = vpop.f32.mrb[0].mxu0
  %865 = vmatprep.mubr.f32.mxu0 0.0
  %866 = vmatmul.mubr.f32.gmra.mrb[0].mxu0 %v718
  %v867 = vpop.f32.mrb[0].mxu0
  %v868 = vadd.f32 %v744, %v867
  %v869 = vpop.f32.mrb[0].mxu0
  %870 = vmatprep.mubr.f32.mxu0 0.0
  %871 = vmatmul.mubr.f32.gmra.mrb[0].mxu0 %v719
  %v872 = vpop.f32.mrb[0].mxu0
  %v873 = vadd.f32 %v744, %v872
  %v874 = vpop.f32.mrb[0].mxu0
  %875 = vmatprep.mubr.f32.mxu0 0.0
  %876 = vmatmul.mubr.f32.gmra.mrb[0].mxu0 %v720
  %v877 = vpop.f32.mrb[0].mxu0
  %v878 = vadd.f32 %v744, %v877
  %v879 = vpop.f32.mrb[0].mxu0
  %880 = vmatprep.mubr.f32.mxu0 0.0
  %881 = vmatmul.mubr.f32.gmra.mrb[0].mxu0 %v721
  %v882 = vpop.f32.mrb[0].mxu0
  %v883 = vadd.f32 %v744, %v882
  %v884 = vpop.f32.mrb[0].mxu0
  %885 = vmatprep.mubr.f32.mxu0 0.0
  %886 = vmatmul.mubr.f32.gmra.mrb[0].mxu0 %v722
  %v887 = vpop.f32.mrb[0].mxu0
  %v888 = vadd.f32 %v744, %v887
  %v889 = vpop.f32.mrb[0].mxu0
  %890 = vdwg.mxu0
  %v891 = vmax.f32 %v813, 0.0
  %v892 = vmax.f32 %v818, 0.0
  %v893 = vmax.f32 %v823, 0.0
  %v894 = vmax.f32 %v828, 0.0
  %v895 = vmax.f32 %v833, 0.0
  %v896 = vmax.f32 %v838, 0.0
  %v897 = vmax.f32 %v843, 0.0
  %v898 = vmax.f32 %v848, 0.0
  %v899 = vmax.f32 %v853, 0.0
  %v900 = vmax.f32 %v858, 0.0
  %v901 = vmax.f32 %v863, 0.0
  %v902 = vmax.f32 %v868, 0.0
  %v903 = vmax.f32 %v873, 0.0
  %v904 = vmax.f32 %v878, 0.0
  %v905 = vmax.f32 %v883, 0.0
  %v906 = vmax.f32 %v888, 0.0
  %v907 = vpack.c.bf16 %v892, %v891
  %v908 = vpack.c.bf16 %v894, %v893
  %v909 = vpack.c.bf16 %v896, %v895
  %v910 = vpack.c.bf16 %v898, %v897
  %v911 = vpack.c.bf16 %v900, %v899
  %v912 = vpack.c.bf16 %v902, %v901
  %v913 = vpack.c.bf16 %v904, %v903
  %v914 = vpack.c.bf16 %v906, %v905
  %915 = vmatprep.subr.bf16.mxu0 0
  %916 = vmatpush1.bf16.msra.mxu0 %v907
  %917 = vmatprep.subr.bf16.mxu0 0
  %918 = vmatpush1.bf16.msra.mxu0 %v908
  %919 = vmatprep.subr.bf16.mxu0 0
  %920 = vmatpush1.bf16.msra.mxu0 %v909
  %921 = vmatprep.subr.bf16.mxu0 0
  %922 = vmatpush1.bf16.msra.mxu0 %v910
  %923 = vmatprep.subr.bf16.mxu0 0
  %924 = vmatpush1.bf16.msra.mxu0 %v911
  %925 = vmatprep.subr.bf16.mxu0 0
  %926 = vmatpush1.bf16.msra.mxu0 %v912
  %927 = vmatprep.subr.bf16.mxu0 0
  %928 = vmatpush1.bf16.msra.mxu0 %v913
  %929 = vmatprep.subr.bf16.mxu0 0
  %930 = vmatpush1.bf16.msra.mxu0 %v914
  %931 = vmatprep.subr.bf16.mxu0 0
  %932 = vmatpush1.bf16.msra.mxu0 0
  %933 = vmatprep.subr.bf16.mxu0 0
  %934 = vmatpush1.bf16.msra.mxu0 0
  %935 = vmatprep.subr.bf16.mxu0 0
  %936 = vmatpush1.bf16.msra.mxu0 0
  %937 = vmatprep.subr.bf16.mxu0 0
  %938 = vmatpush1.bf16.msra.mxu0 0
  %939 = vmatprep.subr.bf16.mxu0 0
  %940 = vmatpush1.bf16.msra.mxu0 0
  %941 = vmatprep.subr.bf16.mxu0 0
  %942 = vmatpush1.bf16.msra.mxu0 0
  %943 = vmatprep.subr.bf16.mxu0 0
  %944 = vmatpush1.bf16.msra.mxu0 0
  %945 = vmatprep.subr.bf16.mxu0 0
  %946 = vmatpush1.bf16.msra.mxu0 0
  %947 = vmatprep.mubr.bf16.mxu0 0
  %948 = vmatmul.mubr.bf16.gmra.mrb[0].mxu0 %v482
  %v949 = vpop.f32.mrb[0].mxu0
  %v950 = vadd.f32 0.0, %v949
  %v951 = vpop.f32.mrb[0].mxu0
  %v952 = vpop.f32.mrb[0].mxu0
  %v953 = vadd.f32 0.0, %v952
  %v954 = vpop.f32.mrb[0].mxu0
  %955 = vmatprep.mubr.bf16.mxu0 0
  %956 = vmatmul.mubr.bf16.gmra.mrb[0].mxu0 %v483
  %v957 = vpop.f32.mrb[0].mxu0
  %v958 = vadd.f32 0.0, %v957
  %v959 = vpop.f32.mrb[0].mxu0
  %v960 = vpop.f32.mrb[0].mxu0
  %v961 = vadd.f32 0.0, %v960
  %v962 = vpop.f32.mrb[0].mxu0
  %963 = vmatprep.mubr.bf16.mxu0 0
  %964 = vmatmul.mubr.bf16.gmra.mrb[0].mxu0 %v484
  %v965 = vpop.f32.mrb[0].mxu0
  %v966 = vadd.f32 0.0, %v965
  %v967 = vpop.f32.mrb[0].mxu0
  %v968 = vpop.f32.mrb[0].mxu0
  %v969 = vadd.f32 0.0, %v968
  %v970 = vpop.f32.mrb[0].mxu0
  %971 = vmatprep.mubr.bf16.mxu0 0
  %972 = vmatmul.mubr.bf16.gmra.mrb[0].mxu0 %v485
  %v973 = vpop.f32.mrb[0].mxu0
  %v974 = vadd.f32 0.0, %v973
  %v975 = vpop.f32.mrb[0].mxu0
  %v976 = vpop.f32.mrb[0].mxu0
  %v977 = vadd.f32 0.0, %v976
  %v978 = vpop.f32.mrb[0].mxu0
  %979 = vmatprep.mubr.bf16.mxu0 0
  %980 = vmatmul.mubr.bf16.gmra.mrb[0].mxu0 %v486
  %v981 = vpop.f32.mrb[0].mxu0
  %v982 = vadd.f32 0.0, %v981
  %v983 = vpop.f32.mrb[0].mxu0
  %v984 = vpop.f32.mrb[0].mxu0
  %v985 = vadd.f32 0.0, %v984
  %v986 = vpop.f32.mrb[0].mxu0
  %987 = vmatprep.mubr.bf16.mxu0 0
  %988 = vmatmul.mubr.bf16.gmra.mrb[0].mxu0 %v487
  %v989 = vpop.f32.mrb[0].mxu0
  %v990 = vadd.f32 0.0, %v989
  %v991 = vpop.f32.mrb[0].mxu0
  %v992 = vpop.f32.mrb[0].mxu0
  %v993 = vadd.f32 0.0, %v992
  %v994 = vpop.f32.mrb[0].mxu0
  %995 = vmatprep.mubr.bf16.mxu0 0
  %996 = vmatmul.mubr.bf16.gmra.mrb[0].mxu0 %v488
  %v997 = vpop.f32.mrb[0].mxu0
  %v998 = vadd.f32 0.0, %v997
  %v999 = vpop.f32.mrb[0].mxu0
  %v1000 = vpop.f32.mrb[0].mxu0
  %v1001 = vadd.f32 0.0, %v1000
  %v1002 = vpop.f32.mrb[0].mxu0
  %1003 = vmatprep.mubr.bf16.mxu0 0
  %1004 = vmatmul.mubr.bf16.gmra.mrb[0].mxu0 %v489
  %v1005 = vpop.f32.mrb[0].mxu0
  %v1006 = vadd.f32 0.0, %v1005
  %v1007 = vpop.f32.mrb[0].mxu0
  %v1008 = vpop.f32.mrb[0].mxu0
  %v1009 = vadd.f32 0.0, %v1008
  %v1010 = vpop.f32.mrb[0].mxu0
  %1011 = vdwg.mxu0
  %v1012 = vadd.f32 %v950, %v953
  %v1013 = vadd.f32 %v1012, %v958
  %v1014 = vadd.f32 %v1013, %v961
  %v1015 = vadd.f32 %v1014, %v966
  %v1016 = vadd.f32 %v1015, %v969
  %v1017 = vadd.f32 %v1016, %v974
  %v1018 = vadd.f32 %v1017, %v977
  %v1019 = vadd.f32 %v1018, %v982
  %v1020 = vadd.f32 %v1019, %v985
  %v1021 = vadd.f32 %v1020, %v990
  %v1022 = vadd.f32 %v1021, %v993
  %v1023 = vadd.f32 %v1022, %v998
  %v1024 = vadd.f32 %v1023, %v1001
  %v1025 = vadd.f32 %v1024, %v1006
  %v1026 = vadd.f32 %v1025, %v1009
  %v1027 = vrot.slane %v1026, 4
  %v1028 = vadd.f32 %v1026, %v1027
  %v1029 = vrot.slane %v1028, 2
  %v1030 = vadd.f32 %v1028, %v1029
  %v1031 = vrot.slane %v1030, 1
  %v1032 = vadd.f32 %v1030, %v1031
  %v1033 = vmul.f32 %v1032, 0.03125
  %v1034 = vmul.f32 %v950, %v950
  %v1035 = vmul.f32 %v953, %v953
  %v1036 = vmul.f32 %v958, %v958
  %v1037 = vmul.f32 %v961, %v961
  %v1038 = vmul.f32 %v966, %v966
  %v1039 = vmul.f32 %v969, %v969
  %v1040 = vmul.f32 %v974, %v974
  %v1041 = vmul.f32 %v977, %v977
  %v1042 = vmul.f32 %v982, %v982
  %v1043 = vmul.f32 %v985, %v985
  %v1044 = vmul.f32 %v990, %v990
  %v1045 = vmul.f32 %v993, %v993
  %v1046 = vmul.f32 %v998, %v998
  %v1047 = vmul.f32 %v1001, %v1001
  %v1048 = vmul.f32 %v1006, %v1006
  %v1049 = vmul.f32 %v1009, %v1009
  %v1050 = vadd.f32 %v1034, %v1035
  %v1051 = vadd.f32 %v1050, %v1036
  %v1052 = vadd.f32 %v1051, %v1037
  %v1053 = vadd.f32 %v1052, %v1038
  %v1054 = vadd.f32 %v1053, %v1039
  %v1055 = vadd.f32 %v1054, %v1040
  %v1056 = vadd.f32 %v1055, %v1041
  %v1057 = vadd.f32 %v1056, %v1042
  %v1058 = vadd.f32 %v1057, %v1043
  %v1059 = vadd.f32 %v1058, %v1044
  %v1060 = vadd.f32 %v1059, %v1045
  %v1061 = vadd.f32 %v1060, %v1046
  %v1062 = vadd.f32 %v1061, %v1047
  %v1063 = vadd.f32 %v1062, %v1048
  %v1064 = vadd.f32 %v1063, %v1049
  %v1065 = vrot.slane %v1064, 4
  %v1066 = vadd.f32 %v1064, %v1065
  %v1067 = vrot.slane %v1066, 2
  %v1068 = vadd.f32 %v1066, %v1067
  %v1069 = vrot.slane %v1068, 1
  %v1070 = vadd.f32 %v1068, %v1069
  %v1071 = vmul.f32 %v1070, 0.03125
  %v1072 = vmul.f32 %v1033, %v1033
  %v1073 = vsub.f32 %v1071, %v1072
  %v1074 = vmax.f32 %v1073, 0.0
  %v1075 = vadd.f32 %v1074, 1e-05
  %v1076 = vrsqrt.pop %v1075
  %v1077 = vld [vmem:[%s10] sm:$0x1]
  %v1078 = vmul.f32 %v1076, %v1077
  %v1079 = vld [vmem:[%s11] sm:$0x1]
  %v1080 = vmul.f32 %v1033, %v1078
  %v1081 = vsub.f32 %v1079, %v1080
  %v1082 = vlaneseq
  %v1083 = vshrl.u32 %v1082, 7
  %v1084 = vsub.s32 0, %v1083
  %v1085 = vrot.slane %v1078, %v1084
  %v1086 = vmul.f32 %v950, %v1085
  %v1087 = vmul.f32 %v953, %v1085
  %v1088 = vmul.f32 %v958, %v1085
  %v1089 = vmul.f32 %v961, %v1085
  %v1090 = vmul.f32 %v966, %v1085
  %v1091 = vmul.f32 %v969, %v1085
  %v1092 = vmul.f32 %v974, %v1085
  %v1093 = vmul.f32 %v977, %v1085
  %v1094 = vmul.f32 %v982, %v1085
  %v1095 = vmul.f32 %v985, %v1085
  %v1096 = vmul.f32 %v990, %v1085
  %v1097 = vmul.f32 %v993, %v1085
  %v1098 = vmul.f32 %v998, %v1085
  %v1099 = vmul.f32 %v1001, %v1085
  %v1100 = vmul.f32 %v1006, %v1085
  %v1101 = vmul.f32 %v1009, %v1085
  %v1103 = vlaneseq
  %v1104 = vshrl.u32 %v1103, 7
  %v1105 = vsub.s32 0, %v1104
  %v1106 = vrot.slane %v1081, %v1105
  %v1108 = vadd.f32 %v1086, %v1106
  %v1109 = vadd.f32 %v1087, %v1106
  %v1110 = vadd.f32 %v1088, %v1106
  %v1111 = vadd.f32 %v1089, %v1106
  %v1112 = vadd.f32 %v1090, %v1106
  %v1113 = vadd.f32 %v1091, %v1106
  %v1114 = vadd.f32 %v1092, %v1106
  %v1115 = vadd.f32 %v1093, %v1106
  %v1116 = vadd.f32 %v1094, %v1106
  %v1117 = vadd.f32 %v1095, %v1106
  %v1118 = vadd.f32 %v1096, %v1106
  %v1119 = vadd.f32 %v1097, %v1106
  %v1120 = vadd.f32 %v1098, %v1106
  %v1121 = vadd.f32 %v1099, %v1106
  %v1122 = vadd.f32 %v1100, %v1106
  %v1123 = vadd.f32 %v1101, %v1106
  %1124 = vst [vmem:[%s12] sm:$0xff] %v1108
  %1125 = vst [vmem:[%s12 + $0x8] sm:$0xff] %v1109
  %1126 = vst [vmem:[%s12 + $0x10] sm:$0xff] %v1110
  %1127 = vst [vmem:[%s12 + $0x18] sm:$0xff] %v1111
  %1128 = vst [vmem:[%s12 + $0x20] sm:$0xff] %v1112
  %1129 = vst [vmem:[%s12 + $0x28] sm:$0xff] %v1113
  %1130 = vst [vmem:[%s12 + $0x30] sm:$0xff] %v1114
  %1131 = vst [vmem:[%s12 + $0x38] sm:$0xff] %v1115
  %1132 = vst [vmem:[%s12 + $0x40] sm:$0xff] %v1116
  %1133 = vst [vmem:[%s12 + $0x48] sm:$0xff] %v1117
  %1134 = vst [vmem:[%s12 + $0x50] sm:$0xff] %v1118
  %1135 = vst [vmem:[%s12 + $0x58] sm:$0xff] %v1119
  %1136 = vst [vmem:[%s12 + $0x60] sm:$0xff] %v1120
  %1137 = vst [vmem:[%s12 + $0x68] sm:$0xff] %v1121
  %1138 = vst [vmem:[%s12 + $0x70] sm:$0xff] %v1122
  %1139 = vst [vmem:[%s12 + $0x78] sm:$0xff] %v1123
  // Predicated region
  $region50: #{gnn_node_forward.1} parent=0 // pred_check
    _
  $region51: #{gnn_node_forward.1} parent=0 // pred_check_branch
    %1141 = sbr.rel (0) target = $region53
  $region52: #{gnn_node_forward.1} parent=0 // pred_region
    _
  $region53: #{gnn_node_forward.1} parent=0 // pred_fallthru
    _
  // Predicated region
  $region54: #{gnn_node_forward.1} parent=0 // pred_check
    _
  $region55: #{gnn_node_forward.1} parent=0 // pred_check_branch
    %1143 = sbr.rel (0) target = $region57
  $region56: #{gnn_node_forward.1} parent=0 // pred_region
    _
  $region57: #{gnn_node_forward.1} parent=0 // pred_fallthru
    _

</llo_original>
